<compile_context>
chip_gen: v6e
topology: v6e:2x2x1
jax: 0.10.0
libtpu: 0.0.40
codegen_flags: <defaults>
</compile_context>

<pallas_src>
import functools
import math

import jax
import jax.numpy as jnp
from jax import lax
from jax.experimental import pallas as pl
from jax.experimental.pallas import tpu as pltpu

D_MODEL = 32
N_HEADS = 4
D_HEAD = D_MODEL // N_HEADS
NORM_EPS = 1e-5
NEG_INF = -1e30  # finite "masked" value; avoids inf arithmetic in the softmax


def _rmsnorm(v, gamma, eps):
    # v: (rows, D) f32, gamma: (1, D) f32
    ms = jnp.mean(v * v, axis=-1, keepdims=True)
    return v * lax.rsqrt(ms + eps) * gamma


def decoder_layer_kernel(
    x_ref,       # (rows, D) f32     rows = B * S
    g1_ref,      # (1, D)    f32     attention_norm weight
    wqkv_ref,    # (D, 3D)   bf16    [Wq * 1/sqrt(d_head) | Wk | Wv]
    wc_ref,      # (D, D)    bf16    c_proj
    g2_ref,      # (1, D)    f32     mlp_norm weight
    w13_ref,     # (D, 8D)   bf16    [fc_1 | fc_3]
    w2_ref,      # (4D, D)   bf16    fc_2
    sel_dh_ref,  # (D, H)    f32     0/1 head-selector (pool lanes -> head)
    sel_hd_ref,  # (H, D)    f32     0/1 head-selector (broadcast head -> lanes)
    mask_ref,    # (S, S)    f32     additive causal mask (0 / NEG_INF)
    o_ref,       # (rows, D)
    *,
    seq_len,
    n_heads,
    d_head,
    eps,
):
    x = x_ref[...].astype(jnp.float32)                    # (rows, D)
    rows, d_model = x.shape
    S = seq_len
    bb = rows // S                                         # batch elements

    g1 = g1_ref[...]
    g2 = g2_ref[...]
    sel_dh = sel_dh_ref[...]                               # (D, H)
    sel_hd = sel_hd_ref[...]                               # (H, D)
    mask = mask_ref[...]                                   # (S, S)

    # ---------------- attention block ----------------
    h = _rmsnorm(x, g1, eps)

    # Fused QKV projection: one (rows, D) x (D, 3D) bf16 MXU matmul, f32 acc.
    qkv = jnp.dot(h.astype(jnp.bfloat16), wqkv_ref[...],
                  preferred_element_type=jnp.float32)      # (rows, 3D)
    q = qkv[:, :d_model].reshape(bb, S, d_model)           # carries 1/sqrt(d_head)
    k = qkv[:, d_model:2 * d_model].reshape(bb, S, d_model)
    v = qkv[:, 2 * d_model:].reshape(bb, S, d_model)

    # All-batch, all-head scores in one shot, never leaving (.., d_model) lanes:
    #   prod[b,i,j,d]   = q[b,i,d] * k[b,j,d]
    #   scores[b,i,j,h] = sum_{d in head h} prod[b,i,j,d]   (pool via sel_dh)
    prod = q[:, :, None, :] * k[:, None, :, :]              # (bb, S, S, D)
    scores = jnp.dot(
        prod.reshape(bb * S * S, d_model), sel_dh,
        preferred_element_type=jnp.float32,
    ).reshape(bb, S, S, n_heads)                            # (bb, S, S, H)

    scores = scores + mask[None, :, :, None]                # causal (additive)
    m = jnp.max(scores, axis=2, keepdims=True)              # (bb, S, 1, H)
    p = jnp.exp(scores - m)
    denom = jnp.sum(p, axis=2, keepdims=True)               # (bb, S, 1, H)
    p = p * pl.reciprocal(denom, approx=True)               # EUP reciprocal

    # Broadcast per-head probs back over their d_model lanes, then weighted
    # sum over keys:  attn[b,i,d] = sum_j p[b,i,j,head(d)] * v[b,j,d]
    p_exp = jnp.dot(
        p.reshape(bb * S * S, n_heads), sel_hd,
        preferred_element_type=jnp.float32,
    ).reshape(bb, S, S, d_model)                            # (bb, S, S, D)
    attn = jnp.sum(p_exp * v[:, None, :, :], axis=2)        # (bb, S, D)
    attn = attn.reshape(rows, d_model)

    y = jnp.dot(attn.astype(jnp.bfloat16), wc_ref[...],
                preferred_element_type=jnp.float32)
    x1 = x + y                                              # first residual

    # ---------------- MLP block ----------------
    h2 = _rmsnorm(x1, g2, eps)
    ag = jnp.dot(h2.astype(jnp.bfloat16), w13_ref[...],
                 preferred_element_type=jnp.float32)        # (rows, 8D)
    d_ff = 4 * d_model
    a = ag[:, :d_ff]
    g = ag[:, d_ff:]
    mlp = jax.nn.silu(a) * g                                # f32 VPU/EUP math
    y2 = jnp.dot(mlp.astype(jnp.bfloat16), w2_ref[...],
                 preferred_element_type=jnp.float32)

    o_ref[...] = (x1 + y2).astype(o_ref.dtype)


def pack_params(params, seq_len):
    """One-time packing: fuse QKV (softmax scale folded into Wq) and fc_1|fc_3,
    cast matmul weights to bf16, and build the tiny attention constants."""
    scale = 1.0 / math.sqrt(D_HEAD)
    wqkv = jnp.concatenate(
        [params["wq"] * scale, params["wk"], params["wv"]], axis=1
    ).astype(jnp.bfloat16)
    w13 = jnp.concatenate([params["w1"], params["w3"]], axis=1).astype(jnp.bfloat16)

    # 0/1 head-selector matrices: sel_dh[d, h] = 1 iff column d belongs to head h.
    cols = jnp.arange(D_MODEL)
    heads = jnp.arange(N_HEADS)
    sel_dh = ((cols[:, None] // D_HEAD) == heads[None, :]).astype(jnp.float32)
    sel_hd = sel_dh.T

    # Additive causal mask (0 on/below diagonal, NEG_INF above).
    qi = jnp.arange(seq_len)[:, None]
    kj = jnp.arange(seq_len)[None, :]
    mask = jnp.where(qi >= kj, 0.0, NEG_INF).astype(jnp.float32)

    return {
        "g_attn": params["g_attn"].reshape(1, D_MODEL).astype(jnp.float32),
        "wqkv": wqkv,
        "wc": params["wc"].astype(jnp.bfloat16),
        "g_mlp": params["g_mlp"].reshape(1, D_MODEL).astype(jnp.float32),
        "w13": w13,
        "w2": params["w2"].astype(jnp.bfloat16),
        "sel_dh": sel_dh,
        "sel_hd": sel_hd,
        "mask": mask,
    }


def decoder_layer(x, packed):
    """x: (B, S, D) float32. packed: output of pack_params()."""
    B, S, D = x.shape
    assert D == D_MODEL
    assert packed["mask"].shape == (S, S), "pack_params seq_len must match input"
    rows = B * S

    x2d = x.reshape(rows, D)

    weights = [
        packed["g_attn"], packed["wqkv"], packed["wc"],
        packed["g_mlp"], packed["w13"], packed["w2"],
        packed["sel_dh"], packed["sel_hd"], packed["mask"],
    ]

    def full_spec(w):
        nd = w.ndim
        return pl.BlockSpec(w.shape, lambda i, _nd=nd: (0,) * _nd)

    io_spec = pl.BlockSpec((rows, D), lambda i: (i, 0))

    kernel = functools.partial(
        decoder_layer_kernel,
        seq_len=S, n_heads=N_HEADS, d_head=D_HEAD, eps=NORM_EPS,
    )

    # Single grid step over the whole (B*S, D) slab: at this size (16 rows) the
    # kernel is latency/overhead-bound, and a grid=(B,) megacore split on v7x
    # would duplicate the weight DMA and per-step pipeline overhead per core.
    # TODO(synk): if rows grow, re-benchmark grid=(B,) "parallel" on v7x and a
    # lane-dense (rows*D/128, 128) output relayout on v5e (32-lane masked vst
    # is the most exposed there); both are measure-first at this problem size.
    out2d = pl.pallas_call(
        kernel,
        out_shape=jax.ShapeDtypeStruct((rows, D), x.dtype),
        grid=(1,),
        in_specs=[io_spec] + [full_spec(w) for w in weights],
        out_specs=io_spec,
        compiler_params=pltpu.CompilerParams(
            dimension_semantics=("arbitrary",),
        ),
    )(x2d, *weights)

    return out2d.reshape(B, S, D)


def init_params(key, d_model=D_MODEL):
    """Deterministic synthetic weights. Matrices stored as (in, out); gammas (D,)."""
    ks = jax.random.split(key, 7)
    s = 0.05
    return {
        "g_attn": jnp.ones((d_model,), jnp.float32),
        "wq": s * jax.random.normal(ks[0], (d_model, d_model), jnp.float32),
        "wk": s * jax.random.normal(ks[1], (d_model, d_model), jnp.float32),
        "wv": s * jax.random.normal(ks[2], (d_model, d_model), jnp.float32),
        "wc": s * jax.random.normal(ks[3], (d_model, d_model), jnp.float32),
        "g_mlp": jnp.ones((d_model,), jnp.float32),
        "w1": s * jax.random.normal(ks[4], (d_model, 4 * d_model), jnp.float32),
        "w3": s * jax.random.normal(ks[5], (d_model, 4 * d_model), jnp.float32),
        "w2": s * jax.random.normal(ks[6], (4 * d_model, d_model), jnp.float32),
    }


def decoder_layer_ref(x, p):
    """Pure-JAX f32 reference mirroring the PyTorch forward (dropout=0, flash causal)."""
    B, S, D = x.shape

    def rms(v, g):
        return v * lax.rsqrt(jnp.mean(v * v, -1, keepdims=True) + NORM_EPS) * g

    h = rms(x, p["g_attn"])
    q = (h @ p["wq"]).reshape(B, S, N_HEADS, D_HEAD).transpose(0, 2, 1, 3)
    k = (h @ p["wk"]).reshape(B, S, N_HEADS, D_HEAD).transpose(0, 2, 1, 3)
    v = (h @ p["wv"]).reshape(B, S, N_HEADS, D_HEAD).transpose(0, 2, 1, 3)
    s = jnp.einsum("bhqd,bhkd->bhqk", q, k) / math.sqrt(D_HEAD)
    mask = jnp.tril(jnp.ones((S, S), bool))
    s = jnp.where(mask, s, -jnp.inf)
    a = jax.nn.softmax(s, axis=-1)
    attn = jnp.einsum("bhqk,bhkd->bhqd", a, v).transpose(0, 2, 1, 3).reshape(B, S, D)
    x1 = x + attn @ p["wc"]

    h2 = rms(x1, p["g_mlp"])
    mlp = jax.nn.silu(h2 @ p["w1"]) * (h2 @ p["w3"])
    return x1 + mlp @ p["w2"]


if __name__ == "__main__":
    key = jax.random.PRNGKey(0)
    k_x, k_p = jax.random.split(key)

    B, S = 2, 8
    x = jax.random.normal(k_x, (B, S, D_MODEL), jnp.float32)
    params = init_params(k_p)
    packed = pack_params(params, seq_len=S)   # one-time pack (off the call path)

    out = decoder_layer(x, packed)
    out = jax.block_until_ready(out)

    ref = decoder_layer_ref(x, params)
    assert out.shape == (B, S, D_MODEL)
    # Tolerance covers bf16 weight storage + bf16 MXU inputs (~0.4% relative on
    # the projection outputs) and the approx EUP reciprocal in the softmax
    # (~1e-3 relative); the residual path stays exact f32, so total error is
    # well under 1e-2 on O(1) outputs.
    assert jnp.allclose(out, ref, atol=1e-2, rtol=1e-2), "mismatch vs reference"

    print("KERNEL_OK")
</pallas_src>

<mosaic_0001>
module attributes {stable_mosaic.version = 11 : i64} {
  func.func @decoder_layer_kernel(%arg0: i32, %arg1: memref<16x32xf32, #tpu.memory_space<vmem>>, %arg2: memref<1x32xf32, #tpu.memory_space<vmem>>, %arg3: memref<32x96xbf16, #tpu.memory_space<vmem>>, %arg4: memref<32x32xbf16, #tpu.memory_space<vmem>>, %arg5: memref<1x32xf32, #tpu.memory_space<vmem>>, %arg6: memref<32x256xbf16, #tpu.memory_space<vmem>>, %arg7: memref<128x32xbf16, #tpu.memory_space<vmem>>, %arg8: memref<32x4xf32, #tpu.memory_space<vmem>>, %arg9: memref<4x32xf32, #tpu.memory_space<vmem>>, %arg10: memref<8x8xf32, #tpu.memory_space<vmem>>, %arg11: memref<16x32xf32, #tpu.memory_space<vmem>>) attributes {dimension_semantics = [#tpu.dimension_semantics<arbitrary>], iteration_bounds = array<i64: 1>, scalar_prefetch = 0 : i64, scratch_operands = 0 : i64, tpu.core_type = #tpu.core_type<tc>, window_params = [{transform_indices = @transform_0, window_bounds = array<i64: 16, 32>}, {pipeline_mode = #tpu.pipeline_mode<synchronous>, transform_indices = @transform_1, window_bounds = array<i64: 1, 32>}, {pipeline_mode = #tpu.pipeline_mode<synchronous>, transform_indices = @transform_2, window_bounds = array<i64: 32, 96>}, {pipeline_mode = #tpu.pipeline_mode<synchronous>, transform_indices = @transform_3, window_bounds = array<i64: 32, 32>}, {pipeline_mode = #tpu.pipeline_mode<synchronous>, transform_indices = @transform_4, window_bounds = array<i64: 1, 32>}, {pipeline_mode = #tpu.pipeline_mode<synchronous>, transform_indices = @transform_5, window_bounds = array<i64: 32, 256>}, {pipeline_mode = #tpu.pipeline_mode<synchronous>, transform_indices = @transform_6, window_bounds = array<i64: 128, 32>}, {pipeline_mode = #tpu.pipeline_mode<synchronous>, transform_indices = @transform_7, window_bounds = array<i64: 32, 4>}, {pipeline_mode = #tpu.pipeline_mode<synchronous>, transform_indices = @transform_8, window_bounds = array<i64: 4, 32>}, {pipeline_mode = #tpu.pipeline_mode<synchronous>, transform_indices = @transform_9, window_bounds = array<i64: 8, 8>}, {transform_indices = @transform_10, window_bounds = array<i64: 16, 32>}]} {
    %c0 = arith.constant 0 : index
    %c0_0 = arith.constant 0 : index
    %0 = vector.load %arg1[%c0, %c0_0] : memref<16x32xf32, #tpu.memory_space<vmem>>, vector<16x32xf32>
    %c0_1 = arith.constant 0 : index
    %c0_2 = arith.constant 0 : index
    %1 = vector.load %arg2[%c0_1, %c0_2] : memref<1x32xf32, #tpu.memory_space<vmem>>, vector<1x32xf32>
    %c0_3 = arith.constant 0 : index
    %c0_4 = arith.constant 0 : index
    %2 = vector.load %arg5[%c0_3, %c0_4] : memref<1x32xf32, #tpu.memory_space<vmem>>, vector<1x32xf32>
    %c0_5 = arith.constant 0 : index
    %c0_6 = arith.constant 0 : index
    %3 = vector.load %arg8[%c0_5, %c0_6] : memref<32x4xf32, #tpu.memory_space<vmem>>, vector<32x4xf32>
    %c0_7 = arith.constant 0 : index
    %c0_8 = arith.constant 0 : index
    %4 = vector.load %arg9[%c0_7, %c0_8] : memref<4x32xf32, #tpu.memory_space<vmem>>, vector<4x32xf32>
    %c0_9 = arith.constant 0 : index
    %c0_10 = arith.constant 0 : index
    %5 = vector.load %arg10[%c0_9, %c0_10] : memref<8x8xf32, #tpu.memory_space<vmem>>, vector<8x8xf32>
    %6 = arith.mulf %0, %0 : vector<16x32xf32>
    %cst = arith.constant dense<0.000000e+00> : vector<16xf32>
    %7 = vector.multi_reduction <add>, %6, %cst [1] : vector<16x32xf32> to vector<16xf32>
    %8 = vector.shape_cast %7 : vector<16xf32> to vector<16x1xf32>
    %cst_11 = arith.constant 3.200000e+01 : f32
    %9 = vector.broadcast %cst_11 : f32 to vector<16x1xf32>
    %10 = arith.divf %8, %9 : vector<16x1xf32>
    %cst_12 = arith.constant 9.99999974E-6 : f32
    %11 = vector.broadcast %cst_12 : f32 to vector<16x1xf32>
    %12 = arith.addf %10, %11 : vector<16x1xf32>
    %13 = math.rsqrt %12 : vector<16x1xf32>
    %14 = vector.broadcast %13 : vector<16x1xf32> to vector<16x32xf32>
    %15 = arith.mulf %0, %14 : vector<16x32xf32>
    %16 = vector.broadcast %1 : vector<1x32xf32> to vector<16x32xf32>
    %17 = arith.mulf %15, %16 : vector<16x32xf32>
    %18 = arith.truncf %17 : vector<16x32xf32> to vector<16x32xbf16>
    %c0_13 = arith.constant 0 : index
    %c0_14 = arith.constant 0 : index
    %19 = vector.load %arg3[%c0_13, %c0_14] : memref<32x96xbf16, #tpu.memory_space<vmem>>, vector<32x96xbf16>
    %cst_15 = arith.constant dense<0.000000e+00> : vector<16x96xf32>
    %20 = tpu.matmul %18, %19, %cst_15 {dimension_numbers = #tpu.dot_dimension_numbers<[1], [0], [0], [1], [0, 0, 1, 1], [], []>} : vector<16x32xbf16>, vector<32x96xbf16>, vector<16x96xf32> -> vector<16x96xf32>
    %21 = vector.extract_strided_slice %20 {offsets = [0, 0], sizes = [16, 32], strides = [1, 1]} : vector<16x96xf32> to vector<16x32xf32>
    %22 = vector.shape_cast %21 : vector<16x32xf32> to vector<2x8x32xf32>
    %23 = vector.extract_strided_slice %20 {offsets = [0, 32], sizes = [16, 32], strides = [1, 1]} : vector<16x96xf32> to vector<16x32xf32>
    %24 = vector.shape_cast %23 : vector<16x32xf32> to vector<2x8x32xf32>
    %25 = vector.extract_strided_slice %20 {offsets = [0, 64], sizes = [16, 32], strides = [1, 1]} : vector<16x96xf32> to vector<16x32xf32>
    %26 = vector.shape_cast %25 : vector<16x32xf32> to vector<2x8x32xf32>
    %27 = vector.shape_cast %22 : vector<2x8x32xf32> to vector<2x8x1x32xf32>
    %28 = vector.shape_cast %24 : vector<2x8x32xf32> to vector<2x1x8x32xf32>
    %29 = vector.broadcast %27 : vector<2x8x1x32xf32> to vector<2x8x8x32xf32>
    %30 = vector.broadcast %28 : vector<2x1x8x32xf32> to vector<2x8x8x32xf32>
    %31 = arith.mulf %29, %30 : vector<2x8x8x32xf32>
    %32 = vector.shape_cast %31 : vector<2x8x8x32xf32> to vector<128x32xf32>
    %cst_16 = arith.constant dense<0.000000e+00> : vector<128x4xf32>
    %33 = tpu.matmul %32, %3, %cst_16 {dimension_numbers = #tpu.dot_dimension_numbers<[1], [0], [0], [1], [0, 0, 1, 1], [], []>} : vector<128x32xf32>, vector<32x4xf32>, vector<128x4xf32> -> vector<128x4xf32>
    %34 = vector.shape_cast %33 : vector<128x4xf32> to vector<2x8x8x4xf32>
    %35 = vector.shape_cast %5 : vector<8x8xf32> to vector<1x8x8x1xf32>
    %36 = vector.broadcast %35 : vector<1x8x8x1xf32> to vector<2x8x8x4xf32>
    %37 = arith.addf %34, %36 : vector<2x8x8x4xf32>
    %cst_17 = arith.constant dense<0xFF800000> : vector<2x8x4xf32>
    %38 = vector.multi_reduction <maximumf>, %37, %cst_17 [2] : vector<2x8x8x4xf32> to vector<2x8x4xf32>
    %39 = vector.shape_cast %38 : vector<2x8x4xf32> to vector<2x8x1x4xf32>
    %40 = vector.broadcast %39 : vector<2x8x1x4xf32> to vector<2x8x8x4xf32>
    %41 = arith.subf %37, %40 : vector<2x8x8x4xf32>
    %42 = math.exp %41 : vector<2x8x8x4xf32>
    %cst_18 = arith.constant dense<0.000000e+00> : vector<2x8x4xf32>
    %43 = vector.multi_reduction <add>, %42, %cst_18 [2] : vector<2x8x8x4xf32> to vector<2x8x4xf32>
    %44 = vector.shape_cast %43 : vector<2x8x4xf32> to vector<2x8x1x4xf32>
    %45 = tpu.reciprocal %44 {approx = true} : vector<2x8x1x4xf32> -> vector<2x8x1x4xf32>
    %46 = vector.broadcast %45 : vector<2x8x1x4xf32> to vector<2x8x8x4xf32>
    %47 = arith.mulf %42, %46 : vector<2x8x8x4xf32>
    %48 = vector.shape_cast %47 : vector<2x8x8x4xf32> to vector<128x4xf32>
    %cst_19 = arith.constant dense<0.000000e+00> : vector<128x32xf32>
    %49 = tpu.matmul %48, %4, %cst_19 {dimension_numbers = #tpu.dot_dimension_numbers<[1], [0], [0], [1], [0, 0, 1, 1], [], []>} : vector<128x4xf32>, vector<4x32xf32>, vector<128x32xf32> -> vector<128x32xf32>
    %50 = vector.shape_cast %49 : vector<128x32xf32> to vector<2x8x8x32xf32>
    %51 = vector.shape_cast %26 : vector<2x8x32xf32> to vector<2x1x8x32xf32>
    %52 = vector.broadcast %51 : vector<2x1x8x32xf32> to vector<2x8x8x32xf32>
    %53 = arith.mulf %50, %52 : vector<2x8x8x32xf32>
    %cst_20 = arith.constant dense<0.000000e+00> : vector<2x8x32xf32>
    %54 = vector.multi_reduction <add>, %53, %cst_20 [2] : vector<2x8x8x32xf32> to vector<2x8x32xf32>
    %55 = vector.shape_cast %54 : vector<2x8x32xf32> to vector<16x32xf32>
    %56 = arith.truncf %55 : vector<16x32xf32> to vector<16x32xbf16>
    %c0_21 = arith.constant 0 : index
    %c0_22 = arith.constant 0 : index
    %57 = vector.load %arg4[%c0_21, %c0_22] : memref<32x32xbf16, #tpu.memory_space<vmem>>, vector<32x32xbf16>
    %cst_23 = arith.constant dense<0.000000e+00> : vector<16x32xf32>
    %58 = tpu.matmul %56, %57, %cst_23 {dimension_numbers = #tpu.dot_dimension_numbers<[1], [0], [0], [1], [0, 0, 1, 1], [], []>} : vector<16x32xbf16>, vector<32x32xbf16>, vector<16x32xf32> -> vector<16x32xf32>
    %59 = arith.addf %0, %58 : vector<16x32xf32>
    %60 = arith.mulf %59, %59 : vector<16x32xf32>
    %cst_24 = arith.constant dense<0.000000e+00> : vector<16xf32>
    %61 = vector.multi_reduction <add>, %60, %cst_24 [1] : vector<16x32xf32> to vector<16xf32>
    %62 = vector.shape_cast %61 : vector<16xf32> to vector<16x1xf32>
    %cst_25 = arith.constant 3.200000e+01 : f32
    %63 = vector.broadcast %cst_25 : f32 to vector<16x1xf32>
    %64 = arith.divf %62, %63 : vector<16x1xf32>
    %cst_26 = arith.constant 9.99999974E-6 : f32
    %65 = vector.broadcast %cst_26 : f32 to vector<16x1xf32>
    %66 = arith.addf %64, %65 : vector<16x1xf32>
    %67 = math.rsqrt %66 : vector<16x1xf32>
    %68 = vector.broadcast %67 : vector<16x1xf32> to vector<16x32xf32>
    %69 = arith.mulf %59, %68 : vector<16x32xf32>
    %70 = vector.broadcast %2 : vector<1x32xf32> to vector<16x32xf32>
    %71 = arith.mulf %69, %70 : vector<16x32xf32>
    %72 = arith.truncf %71 : vector<16x32xf32> to vector<16x32xbf16>
    %c0_27 = arith.constant 0 : index
    %c0_28 = arith.constant 0 : index
    %73 = vector.load %arg6[%c0_27, %c0_28] : memref<32x256xbf16, #tpu.memory_space<vmem>>, vector<32x256xbf16>
    %cst_29 = arith.constant dense<0.000000e+00> : vector<16x256xf32>
    %74 = tpu.matmul %72, %73, %cst_29 {dimension_numbers = #tpu.dot_dimension_numbers<[1], [0], [0], [1], [0, 0, 1, 1], [], []>} : vector<16x32xbf16>, vector<32x256xbf16>, vector<16x256xf32> -> vector<16x256xf32>
    %75 = vector.extract_strided_slice %74 {offsets = [0, 0], sizes = [16, 128], strides = [1, 1]} : vector<16x256xf32> to vector<16x128xf32>
    %76 = vector.extract_strided_slice %74 {offsets = [0, 128], sizes = [16, 128], strides = [1, 1]} : vector<16x256xf32> to vector<16x128xf32>
    %77 = arith.negf %75 : vector<16x128xf32>
    %78 = math.exp %77 : vector<16x128xf32>
    %cst_30 = arith.constant 1.000000e+00 : f32
    %79 = vector.broadcast %cst_30 : f32 to vector<16x128xf32>
    %80 = arith.addf %79, %78 : vector<16x128xf32>
    %81 = arith.divf %79, %80 : vector<16x128xf32>
    %82 = arith.mulf %75, %81 : vector<16x128xf32>
    %83 = arith.mulf %82, %76 : vector<16x128xf32>
    %84 = arith.truncf %83 : vector<16x128xf32> to vector<16x128xbf16>
    %c0_31 = arith.constant 0 : index
    %c0_32 = arith.constant 0 : index
    %85 = vector.load %arg7[%c0_31, %c0_32] : memref<128x32xbf16, #tpu.memory_space<vmem>>, vector<128x32xbf16>
    %cst_33 = arith.constant dense<0.000000e+00> : vector<16x32xf32>
    %86 = tpu.matmul %84, %85, %cst_33 {dimension_numbers = #tpu.dot_dimension_numbers<[1], [0], [0], [1], [0, 0, 1, 1], [], []>} : vector<16x128xbf16>, vector<128x32xbf16>, vector<16x32xf32> -> vector<16x32xf32>
    %87 = arith.addf %59, %86 : vector<16x32xf32>
    %c0_34 = arith.constant 0 : index
    %c0_35 = arith.constant 0 : index
    %88 = vector.load %arg11[%c0_34, %c0_35] : memref<16x32xf32, #tpu.memory_space<vmem>>, vector<16x32xf32>
    tpu.vector_store %arg11[%c0_34, %c0_35], %87 {strides = array<i32>} : memref<16x32xf32, #tpu.memory_space<vmem>>, vector<16x32xf32>,
    return
  }
  func.func @transform_0(%arg0: i32) -> (i32, i32) {
    %c0_i32 = arith.constant 0 : i32
    %c0_i32_0 = arith.constant 0 : i32
    return %arg0, %c0_i32 : i32, i32
  }
  func.func @transform_1(%arg0: i32) -> (i32, i32) {
    %c0_i32 = arith.constant 0 : i32
    %c0_i32_0 = arith.constant 0 : i32
    %c0_i32_1 = arith.constant 0 : i32
    return %c0_i32, %c0_i32_0 : i32, i32
  }
  func.func @transform_2(%arg0: i32) -> (i32, i32) {
    %c0_i32 = arith.constant 0 : i32
    %c0_i32_0 = arith.constant 0 : i32
    %c0_i32_1 = arith.constant 0 : i32
    return %c0_i32, %c0_i32_0 : i32, i32
  }
  func.func @transform_3(%arg0: i32) -> (i32, i32) {
    %c0_i32 = arith.constant 0 : i32
    %c0_i32_0 = arith.constant 0 : i32
    %c0_i32_1 = arith.constant 0 : i32
    return %c0_i32, %c0_i32_0 : i32, i32
  }
  func.func @transform_4(%arg0: i32) -> (i32, i32) {
    %c0_i32 = arith.constant 0 : i32
    %c0_i32_0 = arith.constant 0 : i32
    %c0_i32_1 = arith.constant 0 : i32
    return %c0_i32, %c0_i32_0 : i32, i32
  }
  func.func @transform_5(%arg0: i32) -> (i32, i32) {
    %c0_i32 = arith.constant 0 : i32
    %c0_i32_0 = arith.constant 0 : i32
    %c0_i32_1 = arith.constant 0 : i32
    return %c0_i32, %c0_i32_0 : i32, i32
  }
  func.func @transform_6(%arg0: i32) -> (i32, i32) {
    %c0_i32 = arith.constant 0 : i32
    %c0_i32_0 = arith.constant 0 : i32
    %c0_i32_1 = arith.constant 0 : i32
    return %c0_i32, %c0_i32_0 : i32, i32
  }
  func.func @transform_7(%arg0: i32) -> (i32, i32) {
    %c0_i32 = arith.constant 0 : i32
    %c0_i32_0 = arith.constant 0 : i32
    %c0_i32_1 = arith.constant 0 : i32
    return %c0_i32, %c0_i32_0 : i32, i32
  }
  func.func @transform_8(%arg0: i32) -> (i32, i32) {
    %c0_i32 = arith.constant 0 : i32
    %c0_i32_0 = arith.constant 0 : i32
    %c0_i32_1 = arith.constant 0 : i32
    return %c0_i32, %c0_i32_0 : i32, i32
  }
  func.func @transform_9(%arg0: i32) -> (i32, i32) {
    %c0_i32 = arith.constant 0 : i32
    %c0_i32_0 = arith.constant 0 : i32
    %c0_i32_1 = arith.constant 0 : i32
    return %c0_i32, %c0_i32_0 : i32, i32
  }
  func.func @transform_10(%arg0: i32) -> (i32, i32) {
    %c0_i32 = arith.constant 0 : i32
    %c0_i32_0 = arith.constant 0 : i32
    return %arg0, %c0_i32 : i32, i32
  }
}

</mosaic_0001>

<llo_original>
// kernel: tpu_custom_call.1
$region0: #{tpu_custom_call.1}
  #allocation0 [shape = 'u32[]', space=smem, size = 0x4, offset = 0x4, fixed_abs, tag = 'smem constant byte address 0x4 - core index']
  #allocation1 [shape = 'u32[144,128]{1,0:T(1,128)}', space=vmem, size = 0x12000, scoped, tag = 'internal scratch']
  %s0 = inlined_call_operand.vmem [shape: f32[16,32], index: 0, kind: input, shape index: {}]
  %s1 = inlined_call_operand.vmem [shape: f32[1,32], index: 1, kind: input, shape index: {}]
  %s2 = inlined_call_operand.vmem [shape: bf16[32,96], index: 2, kind: input, shape index: {}]
  %s3 = inlined_call_operand.vmem [shape: bf16[32,32], index: 3, kind: input, shape index: {}]
  %s4 = inlined_call_operand.vmem [shape: f32[1,32], index: 4, kind: input, shape index: {}]
  %s5 = inlined_call_operand.vmem [shape: bf16[32,256], index: 5, kind: input, shape index: {}]
  %s6 = inlined_call_operand.vmem [shape: bf16[128,32], index: 6, kind: input, shape index: {}]
  %s7 = inlined_call_operand.vmem [shape: f32[32,4], index: 7, kind: input, shape index: {}]
  %s8 = inlined_call_operand.vmem [shape: f32[4,32], index: 8, kind: input, shape index: {}]
  %s9 = inlined_call_operand.vmem [shape: f32[8,8], index: 9, kind: input, shape index: {}]
  %s10 = inlined_call_operand.hbm [shape: f32[16,32], index: 10, kind: output, shape index: {}]
  %s11 = sld [smem:[#allocation0]]
  $region50: #{tpu_custom_call.1} parent=0
    _
  %s13 = ssub.s32 1, %s11
  %s14 = scalar_select 0, %s13, %s11
  $region1: #{tpu_custom_call.1} parent=0
    #allocation2 [shape = 'u8[8192]{0}', space=vmem, size = 0x2000, scoped, tag = 'output window, operand 0, single buffered']
    #allocation3 [shape = 's32[1]{0}', space=sflag, size = 0x4, scoped, tag = 'scoped memory for tpu_custom_call.1']
    %15 = vsyncpa [#allocation3], 0
    // Predicated region
    $region2: #{tpu_custom_call.1} parent=1 // pred_check
      _
    $region3: #{tpu_custom_call.1} parent=1 // pred_check_branch
      %17 = sbr.rel (0) target = $region5
    $region4: #{tpu_custom_call.1} parent=1 // pred_region
      _
    $region5: #{tpu_custom_call.1} parent=1 // pred_fallthru
      _
    // Predicated region
    $region6: #{tpu_custom_call.1} parent=1 // pred_check
      _
    $region7: #{tpu_custom_call.1} parent=1 // pred_check_branch
      %19 = sbr.rel (0) target = $region9
    $region8: #{tpu_custom_call.1} parent=1 // pred_region
      _
    $region9: #{tpu_custom_call.1} parent=1 // pred_fallthru
      _
    // Predicated region
    $region10: #{tpu_custom_call.1} parent=1 // pred_check
      _
    $region11: #{tpu_custom_call.1} parent=1 // pred_check_branch
      %21 = sbr.rel (0) target = $region13
    $region12: #{tpu_custom_call.1} parent=1 // pred_region
      _
    $region13: #{tpu_custom_call.1} parent=1 // pred_fallthru
      _
    // Predicated region
    $region14: #{tpu_custom_call.1} parent=1 // pred_check
      _
    $region15: #{tpu_custom_call.1} parent=1 // pred_check_branch
      %23 = sbr.rel (0) target = $region17
    $region16: #{tpu_custom_call.1} parent=1 // pred_region
      _
    $region17: #{tpu_custom_call.1} parent=1 // pred_fallthru
      _
    // Predicated region
    $region18: #{tpu_custom_call.1} parent=1 // pred_check
      _
    $region19: #{tpu_custom_call.1} parent=1 // pred_check_branch
      %25 = sbr.rel (0) target = $region21
    $region20: #{tpu_custom_call.1} parent=1 // pred_region
      _
    $region21: #{tpu_custom_call.1} parent=1 // pred_fallthru
      _
    // Predicated region
    $region22: #{tpu_custom_call.1} parent=1 // pred_check
      _
    $region23: #{tpu_custom_call.1} parent=1 // pred_check_branch
      %27 = sbr.rel (0) target = $region25
    $region24: #{tpu_custom_call.1} parent=1 // pred_region
      _
    $region25: #{tpu_custom_call.1} parent=1 // pred_fallthru
      _
    // Predicated region
    $region26: #{tpu_custom_call.1} parent=1 // pred_check
      _
    $region27: #{tpu_custom_call.1} parent=1 // pred_check_branch
      %29 = sbr.rel (0) target = $region29
    $region28: #{tpu_custom_call.1} parent=1 // pred_region
      _
    $region29: #{tpu_custom_call.1} parent=1 // pred_fallthru
      _
    // Predicated region
    $region30: #{tpu_custom_call.1} parent=1 // pred_check
      _
    $region31: #{tpu_custom_call.1} parent=1 // pred_check_branch
      %31 = sbr.rel (0) target = $region33
    $region32: #{tpu_custom_call.1} parent=1 // pred_region
      _
    $region33: #{tpu_custom_call.1} parent=1 // pred_fallthru
      _
    // Predicated region
    $region34: #{tpu_custom_call.1} parent=1 // pred_check
      _
    $region35: #{tpu_custom_call.1} parent=1 // pred_check_branch
      %33 = sbr.rel (0) target = $region37
    $region36: #{tpu_custom_call.1} parent=1 // pred_region
      _
    $region37: #{tpu_custom_call.1} parent=1 // pred_fallthru
      _
    // Predicated region
    $region38: #{tpu_custom_call.1} parent=1 // pred_check
      _
    $region39: #{tpu_custom_call.1} parent=1 // pred_check_branch
      %35 = sbr.rel (0) target = $region41
    $region40: #{tpu_custom_call.1} parent=1 // pred_region
      _
    $region41: #{tpu_custom_call.1} parent=1 // pred_fallthru
      _
    %v37 = vld [vmem:[%s0] sm:$0xff]
    %v38 = vld [vmem:[%s0 + $0x8] sm:$0xff]
    %v39 = vld [vmem:[%s1] sm:$0x1]
    %v40 = vld [vmem:[%s4] sm:$0x1]
    %v41 = vld [vmem:[%s7] sm:$0xff]
    %v42 = vld [vmem:[%s7 + $0x8] sm:$0xff]
    %v43 = vld [vmem:[%s7 + $0x10] sm:$0xff]
    %v44 = vld [vmem:[%s7 + $0x18] sm:$0xff]
    %v45 = vld [vmem:[%s8] sm:$0xf]
    %v46 = vld [vmem:[%s9] sm:$0xff]
    %v47 = vmul.f32 %v37, %v37
    %v48 = vmul.f32 %v38, %v38
    %vm49 = vcmask 261120
    %v50 = vsel %vm49, %v47, 0.0
    %51 = vadd.xlane.f32.xlu0 %v50
    %v52 = vpop.xlane.xlu0 %51
    %v53 = vsel %vm49, %v48, 0.0
    %54 = vadd.xlane.f32.xlu0 %v53
    %v55 = vpop.xlane.xlu0 %54
    %v56 = vrcp.pop 32.0
    %v57 = vmul.f32 %v52, %v56
    %v58 = vmul.f32 %v55, %v56
    %v59 = vadd.f32 %v57, 1e-05
    %v60 = vadd.f32 %v58, 1e-05
    %v61 = vrsqrt.pop %v59
    %v62 = vrsqrt.pop %v60
    %v63 = vmul.f32 %v37, %v61
    %v64 = vmul.f32 %v38, %v62
    %v66 = vlaneseq
    %v67 = vshrl.u32 %v66, 7
    %v68 = vsub.s32 0, %v67
    %v69 = vrot.slane %v39, %v68
    %v71 = vmul.f32 %v63, %v69
    %v72 = vmul.f32 %v64, %v69
    %v73 = vpack.c.bf16 %v72, %v71
    %v74 = vld [vmem:[%s2] sm:$0xf]
    %v75 = vld [vmem:[%s2 + $0x4] sm:$0xf]
    %v76 = vld [vmem:[%s2 + $0x8] sm:$0xf]
    %v77 = vld [vmem:[%s2 + $0xc] sm:$0xf]
    %v82 = vunpack.c.l.b16 %v74
    %v83 = vunpack.c.l.b16 %v75
    %v84 = vunpack.c.l.b16 %v76
    %v85 = vunpack.c.l.b16 %v77
    %v86 = vpack.c.b16 %v83, %v82
    %v87 = vpack.c.b16 %v85, %v84
    %v91 = vsel %vm49, %v73, 0
    %93 = vmatprep.subr.bf16.mxu0 0
    %94 = vmatpush1.bf16.msra.mxu0 0
    %95 = vmatprep.subr.bf16.mxu0 0
    %96 = vmatpush1.bf16.msra.mxu0 0
    %97 = vmatprep.subr.bf16.mxu0 0
    %98 = vmatpush1.bf16.msra.mxu0 0
    %99 = vmatprep.subr.bf16.mxu0 0
    %100 = vmatpush1.bf16.msra.mxu0 0
    %101 = vmatprep.subr.bf16.mxu0 0
    %102 = vmatpush1.bf16.msra.mxu0 0
    %103 = vmatprep.subr.bf16.mxu0 0
    %104 = vmatpush1.bf16.msra.mxu0 0
    %105 = vmatprep.subr.bf16.mxu0 0
    %106 = vmatpush1.bf16.msra.mxu0 %v87
    %107 = vmatprep.subr.bf16.mxu0 0
    %108 = vmatpush1.bf16.msra.mxu0 %v86
    %109 = vmatprep.subr.bf16.mxu0 0
    %110 = vmatpush2.bf16.msra.mxu0 0
    %111 = vmatprep.subr.bf16.mxu0 0
    %112 = vmatpush2.bf16.msra.mxu0 0
    %113 = vmatprep.subr.bf16.mxu0 0
    %114 = vmatpush2.bf16.msra.mxu0 0
    %115 = vmatprep.subr.bf16.mxu0 0
    %116 = vmatpush2.bf16.msra.mxu0 0
    %117 = vmatprep.subr.bf16.mxu0 0
    %118 = vmatpush2.bf16.msra.mxu0 0
    %119 = vmatprep.subr.bf16.mxu0 0
    %120 = vmatpush2.bf16.msra.mxu0 0
    %121 = vmatprep.subr.bf16.mxu0 0
    %122 = vmatpush2.bf16.msra.mxu0 0
    %123 = vmatprep.subr.bf16.mxu0 0
    %124 = vmatpush2.bf16.msra.mxu0 0
    %125 = vmatprep.mubr.bf16.mxu0 0
    %126 = vmatmul.mubr.bf16.gmra.mxu0 %v91
    %v127 = vpop.f32.mrf.mxu0
    %v128 = vadd.f32 0.0, %v127
    %v129 = vpop.f32.mrf.mxu0
    %v130 = vpop.f32.mrf.mxu0
    %v131 = vadd.f32 0.0, %v130
    %v132 = vpop.f32.mrf.mxu0
    %133 = vdwg.mxu0
    %v136 = vcombine.high %v128, %v128
    %v138 = vunpack.c.l.s4 1966171168
    %v139 = vunpack.c.0.s8 %v138
    %v140 = vlaneseq
    %v141 = vshrl.u32 %v140, 7
    %v142 = vsub.s32 %v139, %v141
    %v143 = vrot.slane %v128, %v142
    %v145 = vunpack.c.l.s4 1966171168
    %v146 = vunpack.c.0.s8 %v145
    %v147 = vlaneseq
    %v148 = vshrl.u32 %v147, 7
    %v149 = vsub.s32 %v146, %v148
    %v150 = vrot.slane %v136, %v149
    %v151 = vcombine.high %v143, %v143
    %v152 = vcombine.high %v150, %v150
    %v154 = vunpack.c.l.s4 1966171168
    %v155 = vunpack.c.0.s8 %v154
    %v156 = vlaneseq
    %v157 = vshrl.u32 %v156, 7
    %v158 = vsub.s32 %v155, %v157
    %v159 = vrot.slane %v143, %v158
    %v161 = vunpack.c.l.s4 1966171168
    %v162 = vunpack.c.0.s8 %v161
    %v163 = vlaneseq
    %v164 = vshrl.u32 %v163, 7
    %v165 = vsub.s32 %v162, %v164
    %v166 = vrot.slane %v150, %v165
    %v168 = vunpack.c.l.s4 1966171168
    %v169 = vunpack.c.0.s8 %v168
    %v170 = vlaneseq
    %v171 = vshrl.u32 %v170, 7
    %v172 = vsub.s32 %v169, %v171
    %v173 = vrot.slane %v151, %v172
    %v175 = vunpack.c.l.s4 1966171168
    %v176 = vunpack.c.0.s8 %v175
    %v177 = vlaneseq
    %v178 = vshrl.u32 %v177, 7
    %v179 = vsub.s32 %v176, %v178
    %v180 = vrot.slane %v152, %v179
    %v181 = vcombine.high %v159, %v159
    %v182 = vcombine.high %v166, %v166
    %v183 = vcombine.high %v173, %v173
    %v184 = vcombine.high %v180, %v180
    %v185 = vcombine.high %v131, %v131
    %v187 = vunpack.c.l.s4 1966171168
    %v188 = vunpack.c.0.s8 %v187
    %v189 = vlaneseq
    %v190 = vshrl.u32 %v189, 7
    %v191 = vsub.s32 %v188, %v190
    %v192 = vrot.slane %v131, %v191
    %v194 = vunpack.c.l.s4 1966171168
    %v195 = vunpack.c.0.s8 %v194
    %v196 = vlaneseq
    %v197 = vshrl.u32 %v196, 7
    %v198 = vsub.s32 %v195, %v197
    %v199 = vrot.slane %v185, %v198
    %v200 = vcombine.high %v192, %v192
    %v201 = vcombine.high %v199, %v199
    %v203 = vunpack.c.l.s4 1966171168
    %v204 = vunpack.c.0.s8 %v203
    %v205 = vlaneseq
    %v206 = vshrl.u32 %v205, 7
    %v207 = vsub.s32 %v204, %v206
    %v208 = vrot.slane %v192, %v207
    %v210 = vunpack.c.l.s4 1966171168
    %v211 = vunpack.c.0.s8 %v210
    %v212 = vlaneseq
    %v213 = vshrl.u32 %v212, 7
    %v214 = vsub.s32 %v211, %v213
    %v215 = vrot.slane %v199, %v214
    %v217 = vunpack.c.l.s4 1966171168
    %v218 = vunpack.c.0.s8 %v217
    %v219 = vlaneseq
    %v220 = vshrl.u32 %v219, 7
    %v221 = vsub.s32 %v218, %v220
    %v222 = vrot.slane %v200, %v221
    %v224 = vunpack.c.l.s4 1966171168
    %v225 = vunpack.c.0.s8 %v224
    %v226 = vlaneseq
    %v227 = vshrl.u32 %v226, 7
    %v228 = vsub.s32 %v225, %v227
    %v229 = vrot.slane %v201, %v228
    %v230 = vcombine.high %v208, %v208
    %v231 = vcombine.high %v215, %v215
    %v232 = vcombine.high %v222, %v222
    %v233 = vcombine.high %v229, %v229
    %v234 = vlaneseq
    %v235 = vshrl.u32 %v234, 7
    %v236 = vsub.s32 0, %v235
    %v237 = vrot.slane %v159, %v236
    %v238 = vlaneseq
    %v239 = vshrl.u32 %v238, 7
    %v240 = vsub.s32 0, %v239
    %v241 = vrot.slane %v173, %v240
    %v242 = vlaneseq
    %v243 = vshrl.u32 %v242, 7
    %v244 = vsub.s32 0, %v243
    %v245 = vrot.slane %v181, %v244
    %v246 = vlaneseq
    %v247 = vshrl.u32 %v246, 7
    %v248 = vsub.s32 0, %v247
    %v249 = vrot.slane %v183, %v248
    %v250 = vlaneseq
    %v251 = vshrl.u32 %v250, 7
    %v252 = vsub.s32 0, %v251
    %v253 = vrot.slane %v166, %v252
    %v254 = vlaneseq
    %v255 = vshrl.u32 %v254, 7
    %v256 = vsub.s32 0, %v255
    %v257 = vrot.slane %v180, %v256
    %v258 = vlaneseq
    %v259 = vshrl.u32 %v258, 7
    %v260 = vsub.s32 0, %v259
    %v261 = vrot.slane %v182, %v260
    %v262 = vlaneseq
    %v263 = vshrl.u32 %v262, 7
    %v264 = vsub.s32 0, %v263
    %v265 = vrot.slane %v184, %v264
    %v266 = vlaneseq
    %v267 = vshrl.u32 %v266, 7
    %v268 = vsub.s32 0, %v267
    %v269 = vrot.slane %v208, %v268
    %v270 = vlaneseq
    %v271 = vshrl.u32 %v270, 7
    %v272 = vsub.s32 0, %v271
    %v273 = vrot.slane %v222, %v272
    %v274 = vlaneseq
    %v275 = vshrl.u32 %v274, 7
    %v276 = vsub.s32 0, %v275
    %v277 = vrot.slane %v230, %v276
    %v278 = vlaneseq
    %v279 = vshrl.u32 %v278, 7
    %v280 = vsub.s32 0, %v279
    %v281 = vrot.slane %v232, %v280
    %v282 = vlaneseq
    %v283 = vshrl.u32 %v282, 7
    %v284 = vsub.s32 0, %v283
    %v285 = vrot.slane %v215, %v284
    %v286 = vlaneseq
    %v287 = vshrl.u32 %v286, 7
    %v288 = vsub.s32 0, %v287
    %v289 = vrot.slane %v229, %v288
    %v290 = vlaneseq
    %v291 = vshrl.u32 %v290, 7
    %v292 = vsub.s32 0, %v291
    %v293 = vrot.slane %v231, %v292
    %v294 = vlaneseq
    %v295 = vshrl.u32 %v294, 7
    %v296 = vsub.s32 0, %v295
    %v297 = vrot.slane %v233, %v296
    %314 = vrot.lane.b32.xlu0 %v128, 96
    %v315 = vpop.permute.xlu0 %314
    %316 = vrot.lane.b32.xlu0 %v131, 96
    %v317 = vpop.permute.xlu0 %316
    %v320 = vmul.f32 %v237, %v315
    %v321 = vmul.f32 %v241, %v315
    %v322 = vmul.f32 %v245, %v315
    %v323 = vmul.f32 %v249, %v315
    %v324 = vmul.f32 %v253, %v315
    %v325 = vmul.f32 %v257, %v315
    %v326 = vmul.f32 %v261, %v315
    %v327 = vmul.f32 %v265, %v315
    %v328 = vmul.f32 %v269, %v317
    %v329 = vmul.f32 %v273, %v317
    %v330 = vmul.f32 %v277, %v317
    %v331 = vmul.f32 %v281, %v317
    %v332 = vmul.f32 %v285, %v317
    %v333 = vmul.f32 %v289, %v317
    %v334 = vmul.f32 %v293, %v317
    %v335 = vmul.f32 %v297, %v317
    %v337 = vsel %vm49, %v320, 0
    %v340 = vsel %vm49, %v321, 0
    %v343 = vsel %vm49, %v322, 0
    %v346 = vsel %vm49, %v323, 0
    %v349 = vsel %vm49, %v324, 0
    %v352 = vsel %vm49, %v325, 0
    %v355 = vsel %vm49, %v326, 0
    %v358 = vsel %vm49, %v327, 0
    %v361 = vsel %vm49, %v328, 0
    %v364 = vsel %vm49, %v329, 0
    %v367 = vsel %vm49, %v330, 0
    %v370 = vsel %vm49, %v331, 0
    %v373 = vsel %vm49, %v332, 0
    %v376 = vsel %vm49, %v333, 0
    %v379 = vsel %vm49, %v334, 0
    %v382 = vsel %vm49, %v335, 0
    %384 = vmatprep.subr.mxu0 0.0
    %385 = vmatpush1.msra.mxu0 0.0
    %386 = vmatprep.subr.mxu0 0.0
    %387 = vmatpush1.msra.mxu0 0.0
    %388 = vmatprep.subr.mxu0 0.0
    %389 = vmatpush1.msra.mxu0 0.0
    %390 = vmatprep.subr.mxu0 0.0
    %391 = vmatpush1.msra.mxu0 0.0
    %392 = vmatprep.subr.mxu0 0.0
    %393 = vmatpush1.msra.mxu0 0.0
    %394 = vmatprep.subr.mxu0 0.0
    %395 = vmatpush1.msra.mxu0 0.0
    %396 = vmatprep.subr.mxu0 0.0
    %397 = vmatpush1.msra.mxu0 0.0
    %398 = vmatprep.subr.mxu0 0.0
    %399 = vmatpush1.msra.mxu0 0.0
    %400 = vmatprep.subr.mxu0 0.0
    %401 = vmatpush1.msra.mxu0 0.0
    %402 = vmatprep.subr.mxu0 0.0
    %403 = vmatpush1.msra.mxu0 0.0
    %404 = vmatprep.subr.mxu0 0.0
    %405 = vmatpush1.msra.mxu0 0.0
    %406 = vmatprep.subr.mxu0 0.0
    %407 = vmatpush1.msra.mxu0 0.0
    %408 = vmatprep.subr.mxu0 0.0
    %409 = vmatpush1.msra.mxu0 %v44
    %410 = vmatprep.subr.mxu0 0.0
    %411 = vmatpush1.msra.mxu0 %v43
    %412 = vmatprep.subr.mxu0 0.0
    %413 = vmatpush1.msra.mxu0 %v42
    %414 = vmatprep.subr.mxu0 0.0
    %415 = vmatpush1.msra.mxu0 %v41
    %416 = vmatprep.subr.mxu0 0.0
    %417 = vmatpush2.msra.mxu0 0.0
    %418 = vmatprep.subr.mxu0 0.0
    %419 = vmatpush2.msra.mxu0 0.0
    %420 = vmatprep.subr.mxu0 0.0
    %421 = vmatpush2.msra.mxu0 0.0
    %422 = vmatprep.subr.mxu0 0.0
    %423 = vmatpush2.msra.mxu0 0.0
    %424 = vmatprep.subr.mxu0 0.0
    %425 = vmatpush2.msra.mxu0 0.0
    %426 = vmatprep.subr.mxu0 0.0
    %427 = vmatpush2.msra.mxu0 0.0
    %428 = vmatprep.subr.mxu0 0.0
    %429 = vmatpush2.msra.mxu0 0.0
    %430 = vmatprep.subr.mxu0 0.0
    %431 = vmatpush2.msra.mxu0 0.0
    %432 = vmatprep.subr.mxu0 0.0
    %433 = vmatpush2.msra.mxu0 0.0
    %434 = vmatprep.subr.mxu0 0.0
    %435 = vmatpush2.msra.mxu0 0.0
    %436 = vmatprep.subr.mxu0 0.0
    %437 = vmatpush2.msra.mxu0 0.0
    %438 = vmatprep.subr.mxu0 0.0
    %439 = vmatpush2.msra.mxu0 0.0
    %440 = vmatprep.subr.mxu0 0.0
    %441 = vmatpush2.msra.mxu0 0.0
    %442 = vmatprep.subr.mxu0 0.0
    %443 = vmatpush2.msra.mxu0 0.0
    %444 = vmatprep.subr.mxu0 0.0
    %445 = vmatpush2.msra.mxu0 0.0
    %446 = vmatprep.subr.mxu0 0.0
    %447 = vmatpush2.msra.mxu0 0.0
    %448 = vmatprep.mubr.f32.mxu0 0.0
    %449 = vmatmul.mubr.f32.gmra.mxu0 %v337
    %v450 = vpop.f32.mrf.mxu0
    %v451 = vadd.f32 0.0, %v450
    %v452 = vpop.f32.mrf.mxu0
    %453 = vmatprep.mubr.f32.mxu0 0.0
    %454 = vmatmul.mubr.f32.gmra.mxu0 %v340
    %v455 = vpop.f32.mrf.mxu0
    %v456 = vadd.f32 0.0, %v455
    %v457 = vpop.f32.mrf.mxu0
    %458 = vmatprep.mubr.f32.mxu0 0.0
    %459 = vmatmul.mubr.f32.gmra.mxu0 %v343
    %v460 = vpop.f32.mrf.mxu0
    %v461 = vadd.f32 0.0, %v460
    %v462 = vpop.f32.mrf.mxu0
    %463 = vmatprep.mubr.f32.mxu0 0.0
    %464 = vmatmul.mubr.f32.gmra.mxu0 %v346
    %v465 = vpop.f32.mrf.mxu0
    %v466 = vadd.f32 0.0, %v465
    %v467 = vpop.f32.mrf.mxu0
    %468 = vmatprep.mubr.f32.mxu0 0.0
    %469 = vmatmul.mubr.f32.gmra.mxu0 %v349
    %v470 = vpop.f32.mrf.mxu0
    %v471 = vadd.f32 0.0, %v470
    %v472 = vpop.f32.mrf.mxu0
    %473 = vmatprep.mubr.f32.mxu0 0.0
    %474 = vmatmul.mubr.f32.gmra.mxu0 %v352
    %v475 = vpop.f32.mrf.mxu0
    %v476 = vadd.f32 0.0, %v475
    %v477 = vpop.f32.mrf.mxu0
    %478 = vmatprep.mubr.f32.mxu0 0.0
    %479 = vmatmul.mubr.f32.gmra.mxu0 %v355
    %v480 = vpop.f32.mrf.mxu0
    %v481 = vadd.f32 0.0, %v480
    %v482 = vpop.f32.mrf.mxu0
    %483 = vmatprep.mubr.f32.mxu0 0.0
    %484 = vmatmul.mubr.f32.gmra.mxu0 %v358
    %v485 = vpop.f32.mrf.mxu0
    %v486 = vadd.f32 0.0, %v485
    %v487 = vpop.f32.mrf.mxu0
    %488 = vmatprep.mubr.f32.mxu0 0.0
    %489 = vmatmul.mubr.f32.gmra.mxu0 %v361
    %v490 = vpop.f32.mrf.mxu0
    %v491 = vadd.f32 0.0, %v490
    %v492 = vpop.f32.mrf.mxu0
    %493 = vmatprep.mubr.f32.mxu0 0.0
    %494 = vmatmul.mubr.f32.gmra.mxu0 %v364
    %v495 = vpop.f32.mrf.mxu0
    %v496 = vadd.f32 0.0, %v495
    %v497 = vpop.f32.mrf.mxu0
    %498 = vmatprep.mubr.f32.mxu0 0.0
    %499 = vmatmul.mubr.f32.gmra.mxu0 %v367
    %v500 = vpop.f32.mrf.mxu0
    %v501 = vadd.f32 0.0, %v500
    %v502 = vpop.f32.mrf.mxu0
    %503 = vmatprep.mubr.f32.mxu0 0.0
    %504 = vmatmul.mubr.f32.gmra.mxu0 %v370
    %v505 = vpop.f32.mrf.mxu0
    %v506 = vadd.f32 0.0, %v505
    %v507 = vpop.f32.mrf.mxu0
    %508 = vmatprep.mubr.f32.mxu0 0.0
    %509 = vmatmul.mubr.f32.gmra.mxu0 %v373
    %v510 = vpop.f32.mrf.mxu0
    %v511 = vadd.f32 0.0, %v510
    %v512 = vpop.f32.mrf.mxu0
    %513 = vmatprep.mubr.f32.mxu0 0.0
    %514 = vmatmul.mubr.f32.gmra.mxu0 %v376
    %v515 = vpop.f32.mrf.mxu0
    %v516 = vadd.f32 0.0, %v515
    %v517 = vpop.f32.mrf.mxu0
    %518 = vmatprep.mubr.f32.mxu0 0.0
    %519 = vmatmul.mubr.f32.gmra.mxu0 %v379
    %v520 = vpop.f32.mrf.mxu0
    %v521 = vadd.f32 0.0, %v520
    %v522 = vpop.f32.mrf.mxu0
    %523 = vmatprep.mubr.f32.mxu0 0.0
    %524 = vmatmul.mubr.f32.gmra.mxu0 %v382
    %v525 = vpop.f32.mrf.mxu0
    %v526 = vadd.f32 0.0, %v525
    %v527 = vpop.f32.mrf.mxu0
    %528 = vdwg.mxu0
    %v529 = vlaneseq
    %v530 = vshrl.u32 %v529, 7
    %v531 = vsub.s32 0, %v530
    %v532 = vrot.slane %v46, %v531
    %534 = vbcast.lane.b32.xlu0 %v532, 256
    %v535 = vpop.permute.xlu0 %534
    %v536 = vlaneseq
    %v537 = vshrl.u32 %v536, 7
    %v538 = vsub.s32 1, %v537
    %v539 = vrot.slane %v46, %v538
    %541 = vbcast.lane.b32.xlu0 %v539, 256
    %v542 = vpop.permute.xlu0 %541
    %v543 = vlaneseq
    %v544 = vshrl.u32 %v543, 7
    %v545 = vsub.s32 2, %v544
    %v546 = vrot.slane %v46, %v545
    %548 = vbcast.lane.b32.xlu0 %v546, 256
    %v549 = vpop.permute.xlu0 %548
    %v550 = vlaneseq
    %v551 = vshrl.u32 %v550, 7
    %v552 = vsub.s32 3, %v551
    %v553 = vrot.slane %v46, %v552
    %555 = vbcast.lane.b32.xlu0 %v553, 256
    %v556 = vpop.permute.xlu0 %555
    %v557 = vlaneseq
    %v558 = vshrl.u32 %v557, 7
    %v559 = vsub.s32 4, %v558
    %v560 = vrot.slane %v46, %v559
    %562 = vbcast.lane.b32.xlu0 %v560, 256
    %v563 = vpop.permute.xlu0 %562
    %v564 = vlaneseq
    %v565 = vshrl.u32 %v564, 7
    %v566 = vsub.s32 5, %v565
    %v567 = vrot.slane %v46, %v566
    %569 = vbcast.lane.b32.xlu0 %v567, 256
    %v570 = vpop.permute.xlu0 %569
    %v571 = vlaneseq
    %v572 = vshrl.u32 %v571, 7
    %v573 = vsub.s32 6, %v572
    %v574 = vrot.slane %v46, %v573
    %576 = vbcast.lane.b32.xlu0 %v574, 256
    %v577 = vpop.permute.xlu0 %576
    %v578 = vlaneseq
    %v579 = vshrl.u32 %v578, 7
    %v580 = vsub.s32 7, %v579
    %v581 = vrot.slane %v46, %v580
    %583 = vbcast.lane.b32.xlu0 %v581, 256
    %v584 = vpop.permute.xlu0 %583
    %v585 = vadd.f32 %v451, %v535
    %v586 = vadd.f32 %v456, %v542
    %v587 = vadd.f32 %v461, %v549
    %v588 = vadd.f32 %v466, %v556
    %v589 = vadd.f32 %v471, %v563
    %v590 = vadd.f32 %v476, %v570
    %v591 = vadd.f32 %v481, %v577
    %v592 = vadd.f32 %v486, %v584
    %v593 = vadd.f32 %v491, %v535
    %v594 = vadd.f32 %v496, %v542
    %v595 = vadd.f32 %v501, %v549
    %v596 = vadd.f32 %v506, %v556
    %v597 = vadd.f32 %v511, %v563
    %v598 = vadd.f32 %v516, %v570
    %v599 = vadd.f32 %v521, %v577
    %v600 = vadd.f32 %v526, %v584
    %vm601 = vcmask 31744
    %v602 = vsel %vm601, %v585, -inf
    %v603 = vrot.slane %v602, 4
    %v604 = vmax.f32 %v602, %v603
    %v605 = vrot.slane %v604, 2
    %v606 = vmax.f32 %v604, %v605
    %v607 = vrot.slane %v606, 1
    %v608 = vmax.f32 %v606, %v607
    %v609 = vsel %vm601, %v586, -inf
    %v610 = vrot.slane %v609, 4
    %v611 = vmax.f32 %v609, %v610
    %v612 = vrot.slane %v611, 2
    %v613 = vmax.f32 %v611, %v612
    %v614 = vrot.slane %v613, 1
    %v615 = vmax.f32 %v613, %v614
    %v616 = vsel %vm601, %v587, -inf
    %v617 = vrot.slane %v616, 4
    %v618 = vmax.f32 %v616, %v617
    %v619 = vrot.slane %v618, 2
    %v620 = vmax.f32 %v618, %v619
    %v621 = vrot.slane %v620, 1
    %v622 = vmax.f32 %v620, %v621
    %v623 = vsel %vm601, %v588, -inf
    %v624 = vrot.slane %v623, 4
    %v625 = vmax.f32 %v623, %v624
    %v626 = vrot.slane %v625, 2
    %v627 = vmax.f32 %v625, %v626
    %v628 = vrot.slane %v627, 1
    %v629 = vmax.f32 %v627, %v628
    %v630 = vsel %vm601, %v589, -inf
    %v631 = vrot.slane %v630, 4
    %v632 = vmax.f32 %v630, %v631
    %v633 = vrot.slane %v632, 2
    %v634 = vmax.f32 %v632, %v633
    %v635 = vrot.slane %v634, 1
    %v636 = vmax.f32 %v634, %v635
    %v637 = vsel %vm601, %v590, -inf
    %v638 = vrot.slane %v637, 4
    %v639 = vmax.f32 %v637, %v638
    %v640 = vrot.slane %v639, 2
    %v641 = vmax.f32 %v639, %v640
    %v642 = vrot.slane %v641, 1
    %v643 = vmax.f32 %v641, %v642
    %v644 = vsel %vm601, %v591, -inf
    %v645 = vrot.slane %v644, 4
    %v646 = vmax.f32 %v644, %v645
    %v647 = vrot.slane %v646, 2
    %v648 = vmax.f32 %v646, %v647
    %v649 = vrot.slane %v648, 1
    %v650 = vmax.f32 %v648, %v649
    %v651 = vsel %vm601, %v592, -inf
    %v652 = vrot.slane %v651, 4
    %v653 = vmax.f32 %v651, %v652
    %v654 = vrot.slane %v653, 2
    %v655 = vmax.f32 %v653, %v654
    %v656 = vrot.slane %v655, 1
    %v657 = vmax.f32 %v655, %v656
    %v658 = vsel %vm601, %v593, -inf
    %v659 = vrot.slane %v658, 4
    %v660 = vmax.f32 %v658, %v659
    %v661 = vrot.slane %v660, 2
    %v662 = vmax.f32 %v660, %v661
    %v663 = vrot.slane %v662, 1
    %v664 = vmax.f32 %v662, %v663
    %v665 = vsel %vm601, %v594, -inf
    %v666 = vrot.slane %v665, 4
    %v667 = vmax.f32 %v665, %v666
    %v668 = vrot.slane %v667, 2
    %v669 = vmax.f32 %v667, %v668
    %v670 = vrot.slane %v669, 1
    %v671 = vmax.f32 %v669, %v670
    %v672 = vsel %vm601, %v595, -inf
    %v673 = vrot.slane %v672, 4
    %v674 = vmax.f32 %v672, %v673
    %v675 = vrot.slane %v674, 2
    %v676 = vmax.f32 %v674, %v675
    %v677 = vrot.slane %v676, 1
    %v678 = vmax.f32 %v676, %v677
    %v679 = vsel %vm601, %v596, -inf
    %v680 = vrot.slane %v679, 4
    %v681 = vmax.f32 %v679, %v680
    %v682 = vrot.slane %v681, 2
    %v683 = vmax.f32 %v681, %v682
    %v684 = vrot.slane %v683, 1
    %v685 = vmax.f32 %v683, %v684
    %v686 = vsel %vm601, %v597, -inf
    %v687 = vrot.slane %v686, 4
    %v688 = vmax.f32 %v686, %v687
    %v689 = vrot.slane %v688, 2
    %v690 = vmax.f32 %v688, %v689
    %v691 = vrot.slane %v690, 1
    %v692 = vmax.f32 %v690, %v691
    %v693 = vsel %vm601, %v598, -inf
    %v694 = vrot.slane %v693, 4
    %v695 = vmax.f32 %v693, %v694
    %v696 = vrot.slane %v695, 2
    %v697 = vmax.f32 %v695, %v696
    %v698 = vrot.slane %v697, 1
    %v699 = vmax.f32 %v697, %v698
    %v700 = vsel %vm601, %v599, -inf
    %v701 = vrot.slane %v700, 4
    %v702 = vmax.f32 %v700, %v701
    %v703 = vrot.slane %v702, 2
    %v704 = vmax.f32 %v702, %v703
    %v705 = vrot.slane %v704, 1
    %v706 = vmax.f32 %v704, %v705
    %v707 = vsel %vm601, %v600, -inf
    %v708 = vrot.slane %v707, 4
    %v709 = vmax.f32 %v707, %v708
    %v710 = vrot.slane %v709, 2
    %v711 = vmax.f32 %v709, %v710
    %v712 = vrot.slane %v711, 1
    %v713 = vmax.f32 %v711, %v712
    %v714 = vsub.f32 %v585, %v608
    %v715 = vsub.f32 %v586, %v615
    %v716 = vsub.f32 %v587, %v622
    %v717 = vsub.f32 %v588, %v629
    %v718 = vsub.f32 %v589, %v636
    %v719 = vsub.f32 %v590, %v643
    %v720 = vsub.f32 %v591, %v650
    %v721 = vsub.f32 %v592, %v657
    %v722 = vsub.f32 %v593, %v664
    %v723 = vsub.f32 %v594, %v671
    %v724 = vsub.f32 %v595, %v678
    %v725 = vsub.f32 %v596, %v685
    %v726 = vsub.f32 %v597, %v692
    %v727 = vsub.f32 %v598, %v699
    %v728 = vsub.f32 %v599, %v706
    %v729 = vsub.f32 %v600, %v713
    %v730 = vmul.f32 %v714, 1.442695
    %v731 = vpow.pop %v730
    %v732 = vmul.f32 %v715, 1.442695
    %v733 = vpow.pop %v732
    %v734 = vmul.f32 %v716, 1.442695
    %v735 = vpow.pop %v734
    %v736 = vmul.f32 %v717, 1.442695
    %v737 = vpow.pop %v736
    %v738 = vmul.f32 %v718, 1.442695
    %v739 = vpow.pop %v738
    %v740 = vmul.f32 %v719, 1.442695
    %v741 = vpow.pop %v740
    %v742 = vmul.f32 %v720, 1.442695
    %v743 = vpow.pop %v742
    %v744 = vmul.f32 %v721, 1.442695
    %v745 = vpow.pop %v744
    %v746 = vmul.f32 %v722, 1.442695
    %v747 = vpow.pop %v746
    %v748 = vmul.f32 %v723, 1.442695
    %v749 = vpow.pop %v748
    %v750 = vmul.f32 %v724, 1.442695
    %v751 = vpow.pop %v750
    %v752 = vmul.f32 %v725, 1.442695
    %v753 = vpow.pop %v752
    %v754 = vmul.f32 %v726, 1.442695
    %v755 = vpow.pop %v754
    %v756 = vmul.f32 %v727, 1.442695
    %v757 = vpow.pop %v756
    %v758 = vmul.f32 %v728, 1.442695
    %v759 = vpow.pop %v758
    %v760 = vmul.f32 %v729, 1.442695
    %v761 = vpow.pop %v760
    %v762 = vsel %vm601, %v731, 0.0
    %v763 = vrot.slane %v762, 4
    %v764 = vadd.f32 %v762, %v763
    %v765 = vrot.slane %v764, 2
    %v766 = vadd.f32 %v764, %v765
    %v767 = vrot.slane %v766, 1
    %v768 = vadd.f32 %v766, %v767
    %v769 = vsel %vm601, %v733, 0.0
    %v770 = vrot.slane %v769, 4
    %v771 = vadd.f32 %v769, %v770
    %v772 = vrot.slane %v771, 2
    %v773 = vadd.f32 %v771, %v772
    %v774 = vrot.slane %v773, 1
    %v775 = vadd.f32 %v773, %v774
    %v776 = vsel %vm601, %v735, 0.0
    %v777 = vrot.slane %v776, 4
    %v778 = vadd.f32 %v776, %v777
    %v779 = vrot.slane %v778, 2
    %v780 = vadd.f32 %v778, %v779
    %v781 = vrot.slane %v780, 1
    %v782 = vadd.f32 %v780, %v781
    %v783 = vsel %vm601, %v737, 0.0
    %v784 = vrot.slane %v783, 4
    %v785 = vadd.f32 %v783, %v784
    %v786 = vrot.slane %v785, 2
    %v787 = vadd.f32 %v785, %v786
    %v788 = vrot.slane %v787, 1
    %v789 = vadd.f32 %v787, %v788
    %v790 = vsel %vm601, %v739, 0.0
    %v791 = vrot.slane %v790, 4
    %v792 = vadd.f32 %v790, %v791
    %v793 = vrot.slane %v792, 2
    %v794 = vadd.f32 %v792, %v793
    %v795 = vrot.slane %v794, 1
    %v796 = vadd.f32 %v794, %v795
    %v797 = vsel %vm601, %v741, 0.0
    %v798 = vrot.slane %v797, 4
    %v799 = vadd.f32 %v797, %v798
    %v800 = vrot.slane %v799, 2
    %v801 = vadd.f32 %v799, %v800
    %v802 = vrot.slane %v801, 1
    %v803 = vadd.f32 %v801, %v802
    %v804 = vsel %vm601, %v743, 0.0
    %v805 = vrot.slane %v804, 4
    %v806 = vadd.f32 %v804, %v805
    %v807 = vrot.slane %v806, 2
    %v808 = vadd.f32 %v806, %v807
    %v809 = vrot.slane %v808, 1
    %v810 = vadd.f32 %v808, %v809
    %v811 = vsel %vm601, %v745, 0.0
    %v812 = vrot.slane %v811, 4
    %v813 = vadd.f32 %v811, %v812
    %v814 = vrot.slane %v813, 2
    %v815 = vadd.f32 %v813, %v814
    %v816 = vrot.slane %v815, 1
    %v817 = vadd.f32 %v815, %v816
    %v818 = vsel %vm601, %v747, 0.0
    %v819 = vrot.slane %v818, 4
    %v820 = vadd.f32 %v818, %v819
    %v821 = vrot.slane %v820, 2
    %v822 = vadd.f32 %v820, %v821
    %v823 = vrot.slane %v822, 1
    %v824 = vadd.f32 %v822, %v823
    %v825 = vsel %vm601, %v749, 0.0
    %v826 = vrot.slane %v825, 4
    %v827 = vadd.f32 %v825, %v826
    %v828 = vrot.slane %v827, 2
    %v829 = vadd.f32 %v827, %v828
    %v830 = vrot.slane %v829, 1
    %v831 = vadd.f32 %v829, %v830
    %v832 = vsel %vm601, %v751, 0.0
    %v833 = vrot.slane %v832, 4
    %v834 = vadd.f32 %v832, %v833
    %v835 = vrot.slane %v834, 2
    %v836 = vadd.f32 %v834, %v835
    %v837 = vrot.slane %v836, 1
    %v838 = vadd.f32 %v836, %v837
    %v839 = vsel %vm601, %v753, 0.0
    %v840 = vrot.slane %v839, 4
    %v841 = vadd.f32 %v839, %v840
    %v842 = vrot.slane %v841, 2
    %v843 = vadd.f32 %v841, %v842
    %v844 = vrot.slane %v843, 1
    %v845 = vadd.f32 %v843, %v844
    %v846 = vsel %vm601, %v755, 0.0
    %v847 = vrot.slane %v846, 4
    %v848 = vadd.f32 %v846, %v847
    %v849 = vrot.slane %v848, 2
    %v850 = vadd.f32 %v848, %v849
    %v851 = vrot.slane %v850, 1
    %v852 = vadd.f32 %v850, %v851
    %v853 = vsel %vm601, %v757, 0.0
    %v854 = vrot.slane %v853, 4
    %v855 = vadd.f32 %v853, %v854
    %v856 = vrot.slane %v855, 2
    %v857 = vadd.f32 %v855, %v856
    %v858 = vrot.slane %v857, 1
    %v859 = vadd.f32 %v857, %v858
    %v860 = vsel %vm601, %v759, 0.0
    %v861 = vrot.slane %v860, 4
    %v862 = vadd.f32 %v860, %v861
    %v863 = vrot.slane %v862, 2
    %v864 = vadd.f32 %v862, %v863
    %v865 = vrot.slane %v864, 1
    %v866 = vadd.f32 %v864, %v865
    %v867 = vsel %vm601, %v761, 0.0
    %v868 = vrot.slane %v867, 4
    %v869 = vadd.f32 %v867, %v868
    %v870 = vrot.slane %v869, 2
    %v871 = vadd.f32 %v869, %v870
    %v872 = vrot.slane %v871, 1
    %v873 = vadd.f32 %v871, %v872
    %v874 = vrcp.pop %v768
    %v875 = vrcp.pop %v775
    %v876 = vrcp.pop %v782
    %v877 = vrcp.pop %v789
    %v878 = vrcp.pop %v796
    %v879 = vrcp.pop %v803
    %v880 = vrcp.pop %v810
    %v881 = vrcp.pop %v817
    %v882 = vrcp.pop %v824
    %v883 = vrcp.pop %v831
    %v884 = vrcp.pop %v838
    %v885 = vrcp.pop %v845
    %v886 = vrcp.pop %v852
    %v887 = vrcp.pop %v859
    %v888 = vrcp.pop %v866
    %v889 = vrcp.pop %v873
    %v890 = vmul.f32 %v731, %v874
    %v891 = vmul.f32 %v733, %v875
    %v892 = vmul.f32 %v735, %v876
    %v893 = vmul.f32 %v737, %v877
    %v894 = vmul.f32 %v739, %v878
    %v895 = vmul.f32 %v741, %v879
    %v896 = vmul.f32 %v743, %v880
    %v897 = vmul.f32 %v745, %v881
    %v898 = vmul.f32 %v747, %v882
    %v899 = vmul.f32 %v749, %v883
    %v900 = vmul.f32 %v751, %v884
    %v901 = vmul.f32 %v753, %v885
    %v902 = vmul.f32 %v755, %v886
    %v903 = vmul.f32 %v757, %v887
    %v904 = vmul.f32 %v759, %v888
    %v905 = vmul.f32 %v761, %v889
    %v907 = vsel %vm601, %v890, 0
    %v910 = vsel %vm601, %v891, 0
    %v913 = vsel %vm601, %v892, 0
    %v916 = vsel %vm601, %v893, 0
    %v919 = vsel %vm601, %v894, 0
    %v922 = vsel %vm601, %v895, 0
    %v925 = vsel %vm601, %v896, 0
    %v928 = vsel %vm601, %v897, 0
    %v931 = vsel %vm601, %v898, 0
    %v934 = vsel %vm601, %v899, 0
    %v937 = vsel %vm601, %v900, 0
    %v940 = vsel %vm601, %v901, 0
    %v943 = vsel %vm601, %v902, 0
    %v946 = vsel %vm601, %v903, 0
    %v949 = vsel %vm601, %v904, 0
    %v952 = vsel %vm601, %v905, 0
    %vm954 = vcmask 1043456
    %v956 = vsel %vm954, %v45, 0
    %958 = vmatprep.subr.mxu0 0.0
    %959 = vmatpush1.msra.mxu0 0.0
    %960 = vmatprep.subr.mxu0 0.0
    %961 = vmatpush1.msra.mxu0 0.0
    %962 = vmatprep.subr.mxu0 0.0
    %963 = vmatpush1.msra.mxu0 0.0
    %964 = vmatprep.subr.mxu0 0.0
    %965 = vmatpush1.msra.mxu0 0.0
    %966 = vmatprep.subr.mxu0 0.0
    %967 = vmatpush1.msra.mxu0 0.0
    %968 = vmatprep.subr.mxu0 0.0
    %969 = vmatpush1.msra.mxu0 0.0
    %970 = vmatprep.subr.mxu0 0.0
    %971 = vmatpush1.msra.mxu0 0.0
    %972 = vmatprep.subr.mxu0 0.0
    %973 = vmatpush1.msra.mxu0 0.0
    %974 = vmatprep.subr.mxu0 0.0
    %975 = vmatpush1.msra.mxu0 0.0
    %976 = vmatprep.subr.mxu0 0.0
    %977 = vmatpush1.msra.mxu0 0.0
    %978 = vmatprep.subr.mxu0 0.0
    %979 = vmatpush1.msra.mxu0 0.0
    %980 = vmatprep.subr.mxu0 0.0
    %981 = vmatpush1.msra.mxu0 0.0
    %982 = vmatprep.subr.mxu0 0.0
    %983 = vmatpush1.msra.mxu0 0.0
    %984 = vmatprep.subr.mxu0 0.0
    %985 = vmatpush1.msra.mxu0 0.0
    %986 = vmatprep.subr.mxu0 0.0
    %987 = vmatpush1.msra.mxu0 0.0
    %988 = vmatprep.subr.mxu0 0.0
    %989 = vmatpush1.msra.mxu0 %v956
    %990 = vmatprep.subr.mxu0 0.0
    %991 = vmatpush2.msra.mxu0 0.0
    %992 = vmatprep.subr.mxu0 0.0
    %993 = vmatpush2.msra.mxu0 0.0
    %994 = vmatprep.subr.mxu0 0.0
    %995 = vmatpush2.msra.mxu0 0.0
    %996 = vmatprep.subr.mxu0 0.0
    %997 = vmatpush2.msra.mxu0 0.0
    %998 = vmatprep.subr.mxu0 0.0
    %999 = vmatpush2.msra.mxu0 0.0
    %1000 = vmatprep.subr.mxu0 0.0
    %1001 = vmatpush2.msra.mxu0 0.0
    %1002 = vmatprep.subr.mxu0 0.0
    %1003 = vmatpush2.msra.mxu0 0.0
    %1004 = vmatprep.subr.mxu0 0.0
    %1005 = vmatpush2.msra.mxu0 0.0
    %1006 = vmatprep.subr.mxu0 0.0
    %1007 = vmatpush2.msra.mxu0 0.0
    %1008 = vmatprep.subr.mxu0 0.0
    %1009 = vmatpush2.msra.mxu0 0.0
    %1010 = vmatprep.subr.mxu0 0.0
    %1011 = vmatpush2.msra.mxu0 0.0
    %1012 = vmatprep.subr.mxu0 0.0
    %1013 = vmatpush2.msra.mxu0 0.0
    %1014 = vmatprep.subr.mxu0 0.0
    %1015 = vmatpush2.msra.mxu0 0.0
    %1016 = vmatprep.subr.mxu0 0.0
    %1017 = vmatpush2.msra.mxu0 0.0
    %1018 = vmatprep.subr.mxu0 0.0
    %1019 = vmatpush2.msra.mxu0 0.0
    %1020 = vmatprep.subr.mxu0 0.0
    %1021 = vmatpush2.msra.mxu0 0.0
    %1022 = vmatprep.mubr.f32.mxu0 0.0
    %1023 = vmatmul.mubr.f32.gmra.mxu0 %v907
    %v1024 = vpop.f32.mrf.mxu0
    %v1025 = vadd.f32 0.0, %v1024
    %v1026 = vpop.f32.mrf.mxu0
    %1027 = vmatprep.mubr.f32.mxu0 0.0
    %1028 = vmatmul.mubr.f32.gmra.mxu0 %v910
    %v1029 = vpop.f32.mrf.mxu0
    %v1030 = vadd.f32 0.0, %v1029
    %v1031 = vpop.f32.mrf.mxu0
    %1032 = vmatprep.mubr.f32.mxu0 0.0
    %1033 = vmatmul.mubr.f32.gmra.mxu0 %v913
    %v1034 = vpop.f32.mrf.mxu0
    %v1035 = vadd.f32 0.0, %v1034
    %v1036 = vpop.f32.mrf.mxu0
    %1037 = vmatprep.mubr.f32.mxu0 0.0
    %1038 = vmatmul.mubr.f32.gmra.mxu0 %v916
    %v1039 = vpop.f32.mrf.mxu0
    %v1040 = vadd.f32 0.0, %v1039
    %v1041 = vpop.f32.mrf.mxu0
    %1042 = vmatprep.mubr.f32.mxu0 0.0
    %1043 = vmatmul.mubr.f32.gmra.mxu0 %v919
    %v1044 = vpop.f32.mrf.mxu0
    %v1045 = vadd.f32 0.0, %v1044
    %v1046 = vpop.f32.mrf.mxu0
    %1047 = vmatprep.mubr.f32.mxu0 0.0
    %1048 = vmatmul.mubr.f32.gmra.mxu0 %v922
    %v1049 = vpop.f32.mrf.mxu0
    %v1050 = vadd.f32 0.0, %v1049
    %v1051 = vpop.f32.mrf.mxu0
    %1052 = vmatprep.mubr.f32.mxu0 0.0
    %1053 = vmatmul.mubr.f32.gmra.mxu0 %v925
    %v1054 = vpop.f32.mrf.mxu0
    %v1055 = vadd.f32 0.0, %v1054
    %v1056 = vpop.f32.mrf.mxu0
    %1057 = vmatprep.mubr.f32.mxu0 0.0
    %1058 = vmatmul.mubr.f32.gmra.mxu0 %v928
    %v1059 = vpop.f32.mrf.mxu0
    %v1060 = vadd.f32 0.0, %v1059
    %v1061 = vpop.f32.mrf.mxu0
    %1062 = vmatprep.mubr.f32.mxu0 0.0
    %1063 = vmatmul.mubr.f32.gmra.mxu0 %v931
    %v1064 = vpop.f32.mrf.mxu0
    %v1065 = vadd.f32 0.0, %v1064
    %v1066 = vpop.f32.mrf.mxu0
    %1067 = vmatprep.mubr.f32.mxu0 0.0
    %1068 = vmatmul.mubr.f32.gmra.mxu0 %v934
    %v1069 = vpop.f32.mrf.mxu0
    %v1070 = vadd.f32 0.0, %v1069
    %v1071 = vpop.f32.mrf.mxu0
    %1072 = vmatprep.mubr.f32.mxu0 0.0
    %1073 = vmatmul.mubr.f32.gmra.mxu0 %v937
    %v1074 = vpop.f32.mrf.mxu0
    %v1075 = vadd.f32 0.0, %v1074
    %v1076 = vpop.f32.mrf.mxu0
    %1077 = vmatprep.mubr.f32.mxu0 0.0
    %1078 = vmatmul.mubr.f32.gmra.mxu0 %v940
    %v1079 = vpop.f32.mrf.mxu0
    %v1080 = vadd.f32 0.0, %v1079
    %v1081 = vpop.f32.mrf.mxu0
    %1082 = vmatprep.mubr.f32.mxu0 0.0
    %1083 = vmatmul.mubr.f32.gmra.mxu0 %v943
    %v1084 = vpop.f32.mrf.mxu0
    %v1085 = vadd.f32 0.0, %v1084
    %v1086 = vpop.f32.mrf.mxu0
    %1087 = vmatprep.mubr.f32.mxu0 0.0
    %1088 = vmatmul.mubr.f32.gmra.mxu0 %v946
    %v1089 = vpop.f32.mrf.mxu0
    %v1090 = vadd.f32 0.0, %v1089
    %v1091 = vpop.f32.mrf.mxu0
    %1092 = vmatprep.mubr.f32.mxu0 0.0
    %1093 = vmatmul.mubr.f32.gmra.mxu0 %v949
    %v1094 = vpop.f32.mrf.mxu0
    %v1095 = vadd.f32 0.0, %v1094
    %v1096 = vpop.f32.mrf.mxu0
    %1097 = vmatprep.mubr.f32.mxu0 0.0
    %1098 = vmatmul.mubr.f32.gmra.mxu0 %v952
    %v1099 = vpop.f32.mrf.mxu0
    %v1100 = vadd.f32 0.0, %v1099
    %v1101 = vpop.f32.mrf.mxu0
    %1102 = vdwg.mxu0
    %1103 = vrot.lane.b32.xlu0 %v128, 64
    %v1104 = vpop.permute.xlu0 %1103
    %1105 = vrot.lane.b32.xlu0 %v131, 64
    %v1106 = vpop.permute.xlu0 %1105
    %v1109 = vmul.f32 %v1025, %v1104
    %v1110 = vmul.f32 %v1030, %v1104
    %v1111 = vmul.f32 %v1035, %v1104
    %v1112 = vmul.f32 %v1040, %v1104
    %v1113 = vmul.f32 %v1045, %v1104
    %v1114 = vmul.f32 %v1050, %v1104
    %v1115 = vmul.f32 %v1055, %v1104
    %v1116 = vmul.f32 %v1060, %v1104
    %v1117 = vmul.f32 %v1065, %v1106
    %v1118 = vmul.f32 %v1070, %v1106
    %v1119 = vmul.f32 %v1075, %v1106
    %v1120 = vmul.f32 %v1080, %v1106
    %v1121 = vmul.f32 %v1085, %v1106
    %v1122 = vmul.f32 %v1090, %v1106
    %v1123 = vmul.f32 %v1095, %v1106
    %v1124 = vmul.f32 %v1100, %v1106
    %v1125 = vsel %vm49, %v1109, 0.0
    %v1126 = vrot.slane %v1125, 4
    %v1127 = vadd.f32 %v1125, %v1126
    %v1128 = vrot.slane %v1127, 2
    %v1129 = vadd.f32 %v1127, %v1128
    %v1130 = vrot.slane %v1129, 1
    %v1131 = vadd.f32 %v1129, %v1130
    %v1132 = vsel %vm49, %v1110, 0.0
    %v1133 = vrot.slane %v1132, 4
    %v1134 = vadd.f32 %v1132, %v1133
    %v1135 = vrot.slane %v1134, 2
    %v1136 = vadd.f32 %v1134, %v1135
    %v1137 = vrot.slane %v1136, 1
    %v1138 = vadd.f32 %v1136, %v1137
    %v1139 = vsel %vm49, %v1111, 0.0
    %v1140 = vrot.slane %v1139, 4
    %v1141 = vadd.f32 %v1139, %v1140
    %v1142 = vrot.slane %v1141, 2
    %v1143 = vadd.f32 %v1141, %v1142
    %v1144 = vrot.slane %v1143, 1
    %v1145 = vadd.f32 %v1143, %v1144
    %v1146 = vsel %vm49, %v1112, 0.0
    %v1147 = vrot.slane %v1146, 4
    %v1148 = vadd.f32 %v1146, %v1147
    %v1149 = vrot.slane %v1148, 2
    %v1150 = vadd.f32 %v1148, %v1149
    %v1151 = vrot.slane %v1150, 1
    %v1152 = vadd.f32 %v1150, %v1151
    %v1153 = vsel %vm49, %v1113, 0.0
    %v1154 = vrot.slane %v1153, 4
    %v1155 = vadd.f32 %v1153, %v1154
    %v1156 = vrot.slane %v1155, 2
    %v1157 = vadd.f32 %v1155, %v1156
    %v1158 = vrot.slane %v1157, 1
    %v1159 = vadd.f32 %v1157, %v1158
    %v1160 = vsel %vm49, %v1114, 0.0
    %v1161 = vrot.slane %v1160, 4
    %v1162 = vadd.f32 %v1160, %v1161
    %v1163 = vrot.slane %v1162, 2
    %v1164 = vadd.f32 %v1162, %v1163
    %v1165 = vrot.slane %v1164, 1
    %v1166 = vadd.f32 %v1164, %v1165
    %v1167 = vsel %vm49, %v1115, 0.0
    %v1168 = vrot.slane %v1167, 4
    %v1169 = vadd.f32 %v1167, %v1168
    %v1170 = vrot.slane %v1169, 2
    %v1171 = vadd.f32 %v1169, %v1170
    %v1172 = vrot.slane %v1171, 1
    %v1173 = vadd.f32 %v1171, %v1172
    %v1174 = vsel %vm49, %v1116, 0.0
    %v1175 = vrot.slane %v1174, 4
    %v1176 = vadd.f32 %v1174, %v1175
    %v1177 = vrot.slane %v1176, 2
    %v1178 = vadd.f32 %v1176, %v1177
    %v1179 = vrot.slane %v1178, 1
    %v1180 = vadd.f32 %v1178, %v1179
    %v1181 = vsel %vm49, %v1117, 0.0
    %v1182 = vrot.slane %v1181, 4
    %v1183 = vadd.f32 %v1181, %v1182
    %v1184 = vrot.slane %v1183, 2
    %v1185 = vadd.f32 %v1183, %v1184
    %v1186 = vrot.slane %v1185, 1
    %v1187 = vadd.f32 %v1185, %v1186
    %v1188 = vsel %vm49, %v1118, 0.0
    %v1189 = vrot.slane %v1188, 4
    %v1190 = vadd.f32 %v1188, %v1189
    %v1191 = vrot.slane %v1190, 2
    %v1192 = vadd.f32 %v1190, %v1191
    %v1193 = vrot.slane %v1192, 1
    %v1194 = vadd.f32 %v1192, %v1193
    %v1195 = vsel %vm49, %v1119, 0.0
    %v1196 = vrot.slane %v1195, 4
    %v1197 = vadd.f32 %v1195, %v1196
    %v1198 = vrot.slane %v1197, 2
    %v1199 = vadd.f32 %v1197, %v1198
    %v1200 = vrot.slane %v1199, 1
    %v1201 = vadd.f32 %v1199, %v1200
    %v1202 = vsel %vm49, %v1120, 0.0
    %v1203 = vrot.slane %v1202, 4
    %v1204 = vadd.f32 %v1202, %v1203
    %v1205 = vrot.slane %v1204, 2
    %v1206 = vadd.f32 %v1204, %v1205
    %v1207 = vrot.slane %v1206, 1
    %v1208 = vadd.f32 %v1206, %v1207
    %v1209 = vsel %vm49, %v1121, 0.0
    %v1210 = vrot.slane %v1209, 4
    %v1211 = vadd.f32 %v1209, %v1210
    %v1212 = vrot.slane %v1211, 2
    %v1213 = vadd.f32 %v1211, %v1212
    %v1214 = vrot.slane %v1213, 1
    %v1215 = vadd.f32 %v1213, %v1214
    %v1216 = vsel %vm49, %v1122, 0.0
    %v1217 = vrot.slane %v1216, 4
    %v1218 = vadd.f32 %v1216, %v1217
    %v1219 = vrot.slane %v1218, 2
    %v1220 = vadd.f32 %v1218, %v1219
    %v1221 = vrot.slane %v1220, 1
    %v1222 = vadd.f32 %v1220, %v1221
    %v1223 = vsel %vm49, %v1123, 0.0
    %v1224 = vrot.slane %v1223, 4
    %v1225 = vadd.f32 %v1223, %v1224
    %v1226 = vrot.slane %v1225, 2
    %v1227 = vadd.f32 %v1225, %v1226
    %v1228 = vrot.slane %v1227, 1
    %v1229 = vadd.f32 %v1227, %v1228
    %v1230 = vsel %vm49, %v1124, 0.0
    %v1231 = vrot.slane %v1230, 4
    %v1232 = vadd.f32 %v1230, %v1231
    %v1233 = vrot.slane %v1232, 2
    %v1234 = vadd.f32 %v1232, %v1233
    %v1235 = vrot.slane %v1234, 1
    %v1236 = vadd.f32 %v1234, %v1235
    %v1237 = vpack.c.bf16 %v1131, %v1131
    %v1238 = vpack.c.bf16 %v1138, %v1138
    %v1239 = vpack.c.bf16 %v1145, %v1145
    %v1240 = vpack.c.bf16 %v1152, %v1152
    %v1241 = vpack.c.bf16 %v1159, %v1159
    %v1242 = vpack.c.bf16 %v1166, %v1166
    %v1243 = vpack.c.bf16 %v1173, %v1173
    %v1244 = vpack.c.bf16 %v1180, %v1180
    %v1245 = vpack.c.bf16 %v1187, %v1187
    %v1246 = vpack.c.bf16 %v1194, %v1194
    %v1247 = vpack.c.bf16 %v1201, %v1201
    %v1248 = vpack.c.bf16 %v1208, %v1208
    %v1249 = vpack.c.bf16 %v1215, %v1215
    %v1250 = vpack.c.bf16 %v1222, %v1222
    %v1251 = vpack.c.bf16 %v1229, %v1229
    %v1252 = vpack.c.bf16 %v1236, %v1236
    %v1253 = vld [vmem:[%s3] sm:$0xf]
    %v1254 = vld [vmem:[%s3 + $0x4] sm:$0xf]
    %v1255 = vld [vmem:[%s3 + $0x8] sm:$0xf]
    %v1256 = vld [vmem:[%s3 + $0xc] sm:$0xf]
    %v1273 = vunpack.c.l.b16 %v1237
    %v1274 = vunpack.c.l.b16 %v1238
    %v1275 = vunpack.c.l.b16 %v1239
    %v1276 = vunpack.c.l.b16 %v1240
    %v1277 = vunpack.c.l.b16 %v1241
    %v1278 = vunpack.c.l.b16 %v1242
    %v1279 = vunpack.c.l.b16 %v1243
    %v1280 = vunpack.c.l.b16 %v1244
    %v1281 = vunpack.c.l.b16 %v1245
    %v1282 = vunpack.c.l.b16 %v1246
    %v1283 = vunpack.c.l.b16 %v1247
    %v1284 = vunpack.c.l.b16 %v1248
    %v1285 = vunpack.c.l.b16 %v1249
    %v1286 = vunpack.c.l.b16 %v1250
    %v1287 = vunpack.c.l.b16 %v1251
    %v1288 = vunpack.c.l.b16 %v1252
    %vm1289 = vcmask 1041409
    %v1290 = vsel %vm1289, %v1274, %v1273
    %vm1291 = vcmask 1042434
    %v1292 = vsel %vm1291, %v1275, %v1290
    %vm1293 = vcmask 1043459
    %v1294 = vsel %vm1293, %v1276, %v1292
    %vm1295 = vcmask 1044484
    %v1296 = vsel %vm1295, %v1277, %v1294
    %vm1297 = vcmask 1045509
    %v1298 = vsel %vm1297, %v1278, %v1296
    %vm1299 = vcmask 1046534
    %v1300 = vsel %vm1299, %v1279, %v1298
    %vm1301 = vcmask 1047559
    %v1302 = vsel %vm1301, %v1280, %v1300
    %v1303 = vsel %vm1289, %v1282, %v1281
    %v1304 = vsel %vm1291, %v1283, %v1303
    %v1305 = vsel %vm1293, %v1284, %v1304
    %v1306 = vsel %vm1295, %v1285, %v1305
    %v1307 = vsel %vm1297, %v1286, %v1306
    %v1308 = vsel %vm1299, %v1287, %v1307
    %v1309 = vsel %vm1301, %v1288, %v1308
    %v1310 = vpack.c.b16 %v1309, %v1302
    %v1315 = vunpack.c.l.b16 %v1253
    %v1316 = vunpack.c.l.b16 %v1254
    %v1317 = vunpack.c.l.b16 %v1255
    %v1318 = vunpack.c.l.b16 %v1256
    %v1319 = vpack.c.b16 %v1316, %v1315
    %v1320 = vpack.c.b16 %v1318, %v1317
    %v1324 = vsel %vm49, %v1310, 0
    %1326 = vmatprep.subr.bf16.mxu0 0
    %1327 = vmatpush1.bf16.msra.mxu0 0
    %1328 = vmatprep.subr.bf16.mxu0 0
    %1329 = vmatpush1.bf16.msra.mxu0 0
    %1330 = vmatprep.subr.bf16.mxu0 0
    %1331 = vmatpush1.bf16.msra.mxu0 0
    %1332 = vmatprep.subr.bf16.mxu0 0
    %1333 = vmatpush1.bf16.msra.mxu0 0
    %1334 = vmatprep.subr.bf16.mxu0 0
    %1335 = vmatpush1.bf16.msra.mxu0 0
    %1336 = vmatprep.subr.bf16.mxu0 0
    %1337 = vmatpush1.bf16.msra.mxu0 0
    %1338 = vmatprep.subr.bf16.mxu0 0
    %1339 = vmatpush1.bf16.msra.mxu0 %v1320
    %1340 = vmatprep.subr.bf16.mxu0 0
    %1341 = vmatpush1.bf16.msra.mxu0 %v1319
    %1342 = vmatprep.subr.bf16.mxu0 0
    %1343 = vmatpush2.bf16.msra.mxu0 0
    %1344 = vmatprep.subr.bf16.mxu0 0
    %1345 = vmatpush2.bf16.msra.mxu0 0
    %1346 = vmatprep.subr.bf16.mxu0 0
    %1347 = vmatpush2.bf16.msra.mxu0 0
    %1348 = vmatprep.subr.bf16.mxu0 0
    %1349 = vmatpush2.bf16.msra.mxu0 0
    %1350 = vmatprep.subr.bf16.mxu0 0
    %1351 = vmatpush2.bf16.msra.mxu0 0
    %1352 = vmatprep.subr.bf16.mxu0 0
    %1353 = vmatpush2.bf16.msra.mxu0 0
    %1354 = vmatprep.subr.bf16.mxu0 0
    %1355 = vmatpush2.bf16.msra.mxu0 0
    %1356 = vmatprep.subr.bf16.mxu0 0
    %1357 = vmatpush2.bf16.msra.mxu0 0
    %1358 = vmatprep.mubr.bf16.mxu0 0
    %1359 = vmatmul.mubr.bf16.gmra.mxu0 %v1324
    %v1360 = vpop.f32.mrf.mxu0
    %v1361 = vadd.f32 0.0, %v1360
    %v1362 = vpop.f32.mrf.mxu0
    %v1363 = vpop.f32.mrf.mxu0
    %v1364 = vadd.f32 0.0, %v1363
    %v1365 = vpop.f32.mrf.mxu0
    %1366 = vdwg.mxu0
    %v1367 = vadd.f32 %v37, %v1361
    %v1368 = vadd.f32 %v38, %v1364
    %v1369 = vmul.f32 %v1367, %v1367
    %v1370 = vmul.f32 %v1368, %v1368
    %v1371 = vsel %vm49, %v1369, 0.0
    %1372 = vadd.xlane.f32.xlu0 %v1371
    %v1373 = vpop.xlane.xlu0 %1372
    %v1374 = vsel %vm49, %v1370, 0.0
    %1375 = vadd.xlane.f32.xlu0 %v1374
    %v1376 = vpop.xlane.xlu0 %1375
    %v1377 = vmul.f32 %v1373, %v56
    %v1378 = vmul.f32 %v1376, %v56
    %v1379 = vadd.f32 %v1377, 1e-05
    %v1380 = vadd.f32 %v1378, 1e-05
    %v1381 = vrsqrt.pop %v1379
    %v1382 = vrsqrt.pop %v1380
    %v1383 = vmul.f32 %v1367, %v1381
    %v1384 = vmul.f32 %v1368, %v1382
    %v1386 = vlaneseq
    %v1387 = vshrl.u32 %v1386, 7
    %v1388 = vsub.s32 0, %v1387
    %v1389 = vrot.slane %v40, %v1388
    %v1391 = vmul.f32 %v1383, %v1389
    %v1392 = vmul.f32 %v1384, %v1389
    %v1393 = vpack.c.bf16 %v1392, %v1391
    %v1394 = vld [vmem:[%s5] sm:$0xff]
    %v1395 = vld [vmem:[%s5 + $0x8] sm:$0xff]
    %v1396 = vld [vmem:[%s5 + $0x10] sm:$0xff]
    %v1397 = vld [vmem:[%s5 + $0x18] sm:$0xff]
    %v1402 = vunpack.c.l.b16 %v1394
    %v1403 = vunpack.c.h.b16 %v1394
    %v1404 = vunpack.c.l.b16 %v1395
    %v1405 = vunpack.c.h.b16 %v1395
    %v1406 = vunpack.c.l.b16 %v1396
    %v1407 = vunpack.c.h.b16 %v1396
    %v1408 = vunpack.c.l.b16 %v1397
    %v1409 = vunpack.c.h.b16 %v1397
    %v1410 = vpack.c.b16 %v1404, %v1402
    %v1411 = vpack.c.b16 %v1405, %v1403
    %v1412 = vpack.c.b16 %v1408, %v1406
    %v1413 = vpack.c.b16 %v1409, %v1407
    %v1419 = vsel %vm49, %v1393, 0
    %1421 = vmatprep.subr.bf16.mxu0 0
    %1422 = vmatpush1.bf16.msra.mxu0 0
    %1423 = vmatprep.subr.bf16.mxu0 0
    %1424 = vmatpush1.bf16.msra.mxu0 0
    %1425 = vmatprep.subr.bf16.mxu0 0
    %1426 = vmatpush1.bf16.msra.mxu0 0
    %1427 = vmatprep.subr.bf16.mxu0 0
    %1428 = vmatpush1.bf16.msra.mxu0 0
    %1429 = vmatprep.subr.bf16.mxu0 0
    %1430 = vmatpush1.bf16.msra.mxu0 0
    %1431 = vmatprep.subr.bf16.mxu0 0
    %1432 = vmatpush1.bf16.msra.mxu0 0
    %1433 = vmatprep.subr.bf16.mxu0 %v1413
    %1434 = vmatpush1.bf16.msra.mxu0 %v1412
    %1435 = vmatprep.subr.bf16.mxu0 %v1411
    %1436 = vmatpush1.bf16.msra.mxu0 %v1410
    %1437 = vmatprep.subr.bf16.mxu0 0
    %1438 = vmatpush2.bf16.msra.mxu0 0
    %1439 = vmatprep.subr.bf16.mxu0 0
    %1440 = vmatpush2.bf16.msra.mxu0 0
    %1441 = vmatprep.subr.bf16.mxu0 0
    %1442 = vmatpush2.bf16.msra.mxu0 0
    %1443 = vmatprep.subr.bf16.mxu0 0
    %1444 = vmatpush2.bf16.msra.mxu0 0
    %1445 = vmatprep.subr.bf16.mxu0 0
    %1446 = vmatpush2.bf16.msra.mxu0 0
    %1447 = vmatprep.subr.bf16.mxu0 0
    %1448 = vmatpush2.bf16.msra.mxu0 0
    %1449 = vmatprep.subr.bf16.mxu0 0
    %1450 = vmatpush2.bf16.msra.mxu0 0
    %1451 = vmatprep.subr.bf16.mxu0 0
    %1452 = vmatpush2.bf16.msra.mxu0 0
    %1453 = vmatprep.mubr.bf16.mxu0 0
    %1454 = vmatmul.mubr.bf16.gmra.mxu0 %v1419
    %v1455 = vpop.f32.mrf.mxu0
    %v1456 = vadd.f32 0.0, %v1455
    %v1457 = vpop.f32.mrf.mxu0
    %v1458 = vadd.f32 0.0, %v1457
    %v1459 = vpop.f32.mrf.mxu0
    %v1460 = vadd.f32 0.0, %v1459
    %v1461 = vpop.f32.mrf.mxu0
    %v1462 = vadd.f32 0.0, %v1461
    %1463 = vdwg.mxu0
    %v1464 = vxor.u32 %v1456, 2147483648
    %v1465 = vxor.u32 %v1460, 2147483648
    %v1466 = vmul.f32 %v1464, 1.442695
    %v1467 = vpow.pop %v1466
    %v1468 = vmul.f32 %v1465, 1.442695
    %v1469 = vpow.pop %v1468
    %v1470 = vadd.f32 %v1467, 1.0
    %v1471 = vadd.f32 %v1469, 1.0
    %v1472 = vrcp.pop %v1470
    %v1473 = vmul.f32 1.0, %v1472
    %v1474 = vrcp.pop %v1471
    %v1475 = vmul.f32 1.0, %v1474
    %v1476 = vmul.f32 %v1456, %v1473
    %v1477 = vmul.f32 %v1460, %v1475
    %v1478 = vmul.f32 %v1476, %v1458
    %v1479 = vmul.f32 %v1477, %v1462
    %v1480 = vpack.c.bf16 %v1479, %v1478
    %v1481 = vld [vmem:[%s6] sm:$0xf]
    %v1482 = vld [vmem:[%s6 + $0x4] sm:$0xf]
    %v1483 = vld [vmem:[%s6 + $0x8] sm:$0xf]
    %v1484 = vld [vmem:[%s6 + $0xc] sm:$0xf]
    %v1485 = vld [vmem:[%s6 + $0x10] sm:$0xf]
    %v1486 = vld [vmem:[%s6 + $0x14] sm:$0xf]
    %v1487 = vld [vmem:[%s6 + $0x18] sm:$0xf]
    %v1488 = vld [vmem:[%s6 + $0x1c] sm:$0xf]
    %v1489 = vld [vmem:[%s6 + $0x20] sm:$0xf]
    %v1490 = vld [vmem:[%s6 + $0x24] sm:$0xf]
    %v1491 = vld [vmem:[%s6 + $0x28] sm:$0xf]
    %v1492 = vld [vmem:[%s6 + $0x2c] sm:$0xf]
    %v1493 = vld [vmem:[%s6 + $0x30] sm:$0xf]
    %v1494 = vld [vmem:[%s6 + $0x34] sm:$0xf]
    %v1495 = vld [vmem:[%s6 + $0x38] sm:$0xf]
    %v1496 = vld [vmem:[%s6 + $0x3c] sm:$0xf]
    %v1513 = vunpack.c.l.b16 %v1481
    %v1514 = vunpack.c.l.b16 %v1482
    %v1515 = vunpack.c.l.b16 %v1483
    %v1516 = vunpack.c.l.b16 %v1484
    %v1517 = vunpack.c.l.b16 %v1485
    %v1518 = vunpack.c.l.b16 %v1486
    %v1519 = vunpack.c.l.b16 %v1487
    %v1520 = vunpack.c.l.b16 %v1488
    %v1521 = vunpack.c.l.b16 %v1489
    %v1522 = vunpack.c.l.b16 %v1490
    %v1523 = vunpack.c.l.b16 %v1491
    %v1524 = vunpack.c.l.b16 %v1492
    %v1525 = vunpack.c.l.b16 %v1493
    %v1526 = vunpack.c.l.b16 %v1494
    %v1527 = vunpack.c.l.b16 %v1495
    %v1528 = vunpack.c.l.b16 %v1496
    %v1529 = vpack.c.b16 %v1514, %v1513
    %v1530 = vpack.c.b16 %v1516, %v1515
    %v1531 = vpack.c.b16 %v1518, %v1517
    %v1532 = vpack.c.b16 %v1520, %v1519
    %v1533 = vpack.c.b16 %v1522, %v1521
    %v1534 = vpack.c.b16 %v1524, %v1523
    %v1535 = vpack.c.b16 %v1526, %v1525
    %v1536 = vpack.c.b16 %v1528, %v1527
    %1545 = vmatprep.subr.bf16.mxu0 0
    %1546 = vmatpush1.bf16.msra.mxu0 %v1536
    %1547 = vmatprep.subr.bf16.mxu0 0
    %1548 = vmatpush1.bf16.msra.mxu0 %v1535
    %1549 = vmatprep.subr.bf16.mxu0 0
    %1550 = vmatpush1.bf16.msra.mxu0 %v1534
    %1551 = vmatprep.subr.bf16.mxu0 0
    %1552 = vmatpush1.bf16.msra.mxu0 %v1533
    %1553 = vmatprep.subr.bf16.mxu0 0
    %1554 = vmatpush1.bf16.msra.mxu0 %v1532
    %1555 = vmatprep.subr.bf16.mxu0 0
    %1556 = vmatpush1.bf16.msra.mxu0 %v1531
    %1557 = vmatprep.subr.bf16.mxu0 0
    %1558 = vmatpush1.bf16.msra.mxu0 %v1530
    %1559 = vmatprep.subr.bf16.mxu0 0
    %1560 = vmatpush1.bf16.msra.mxu0 %v1529
    %1561 = vmatprep.subr.bf16.mxu0 0
    %1562 = vmatpush2.bf16.msra.mxu0 0
    %1563 = vmatprep.subr.bf16.mxu0 0
    %1564 = vmatpush2.bf16.msra.mxu0 0
    %1565 = vmatprep.subr.bf16.mxu0 0
    %1566 = vmatpush2.bf16.msra.mxu0 0
    %1567 = vmatprep.subr.bf16.mxu0 0
    %1568 = vmatpush2.bf16.msra.mxu0 0
    %1569 = vmatprep.subr.bf16.mxu0 0
    %1570 = vmatpush2.bf16.msra.mxu0 0
    %1571 = vmatprep.subr.bf16.mxu0 0
    %1572 = vmatpush2.bf16.msra.mxu0 0
    %1573 = vmatprep.subr.bf16.mxu0 0
    %1574 = vmatpush2.bf16.msra.mxu0 0
    %1575 = vmatprep.subr.bf16.mxu0 0
    %1576 = vmatpush2.bf16.msra.mxu0 0
    %1577 = vmatprep.mubr.bf16.mxu0 0
    %1578 = vmatmul.mubr.bf16.gmra.mxu0 %v1480
    %v1579 = vpop.f32.mrf.mxu0
    %v1580 = vadd.f32 0.0, %v1579
    %v1581 = vpop.f32.mrf.mxu0
    %v1582 = vpop.f32.mrf.mxu0
    %v1583 = vadd.f32 0.0, %v1582
    %v1584 = vpop.f32.mrf.mxu0
    %1585 = vdwg.mxu0
    %v1586 = vadd.f32 %v1367, %v1580
    %v1587 = vadd.f32 %v1368, %v1583
    %1588 = vst.msk [vmem:[#allocation2] sm:$0xff] %vm49, %v1586
    %1589 = vst.msk [vmem:[#allocation2 + $0x8] sm:$0xff] %vm49, %v1587
    // Predicated region
    $region42: #{tpu_custom_call.1} parent=1 // pred_check
      _
    $region43: #{tpu_custom_call.1} parent=1 // pred_check_branch
      %1591 = sbr.rel (0) target = $region45
    $region44: #{tpu_custom_call.1} parent=1 // pred_region
      %s1593 = ssub.s32 256, 256
      %1594 = vsyncadd [#allocation3], %s1593
      %s1595 = sshll.u32 [#allocation2], 4
      %s1596 = int_to_ptr.vmem [resolvable:$true] %s1595
      %1601 = dma.vmem_to_hbm [thread:$0]  %s1596, 256, %s10, [#allocation3], 128, 128, 8
    $region45: #{tpu_custom_call.1} parent=1 // pred_fallthru
      _
    // Predicated region
    $region46: #{tpu_custom_call.1} parent=1 // pred_check
      _
    $region47: #{tpu_custom_call.1} parent=1 // pred_check_branch
      %1603 = sbr.rel (0) target = $region49
    $region48: #{tpu_custom_call.1} parent=1 // pred_region
      %1604 = dma.done [#allocation3], 256
    $region49: #{tpu_custom_call.1} parent=1 // pred_fallthru
      _
    %1605 = vsyncpa [#allocation3], 1

</llo_original>
